<compile_context>
chip_gen: v5e
topology: v5e:2x2
jax: 0.10.0
libtpu: 0.0.40
codegen_flags: <defaults>
</compile_context>

<pallas_src>
import functools

import jax
import jax.numpy as jnp
import numpy as np
from jax import lax
from jax.experimental import pallas as pl
from jax.experimental.pallas import tpu as pltpu

EPS = 1e-5


# ----------------------------------------------------------------------------
# In-kernel helpers
# ----------------------------------------------------------------------------
def _channel_fold_tile(w, c):
    """Constant 0/1 matrices mapping lane index l = w*C + c <-> channel c.

    fold: (W*C, C)  -- per-lane row-vector @ fold = per-channel sums
    tile: (C, W*C)  -- per-channel row-vector @ tile = per-lane (tiled) vector
    Built from 2-D broadcasted_iota so no reshapes / transposes are required.
    """
    li = lax.broadcasted_iota(jnp.int32, (w * c, c), 0)
    ci = lax.broadcasted_iota(jnp.int32, (w * c, c), 1)
    fold = (li % c == ci).astype(jnp.float32)
    lj = lax.broadcasted_iota(jnp.int32, (c, w * c), 1)
    cj = lax.broadcasted_iota(jnp.int32, (c, w * c), 0)
    tile = (lj % c == cj).astype(jnp.float32)
    return fold, tile


def _bn_lane_dense(acc, gamma_1c, beta_1c, fold, tile, m, relu):
    """Training-mode BatchNorm2d on a lane-dense (N*H, W*C) f32 slab.

    Single-pass statistics (sum + sum-of-squares, fused into one tiny matmul),
    biased variance, applied as a per-channel affine on full 128-lane vregs.
    NOTE: E[x^2]-E[x]^2 in f32 is fine at demo-scale m; switch to two-pass
    accumulation when tiling to ResNet-scale m.
    """
    inv_m = 1.0 / float(m)
    sums = jnp.concatenate(
        [jnp.sum(acc, axis=0, keepdims=True),
         jnp.sum(acc * acc, axis=0, keepdims=True)], axis=0)          # (2, W*C)
    stats = jnp.dot(sums, fold, preferred_element_type=jnp.float32)   # (2, C)
    mean = stats[0:1, :] * inv_m
    var = stats[1:2, :] * inv_m - mean * mean
    scale = gamma_1c * lax.rsqrt(var + EPS)                           # (1, C)
    shift = beta_1c - mean * scale                                    # (1, C)
    ss = jnp.concatenate([scale, shift], axis=0)                      # (2, C)
    ss_lane = jnp.dot(ss, tile, preferred_element_type=jnp.float32)   # (2, W*C)
    y = acc * ss_lane[0:1, :] + ss_lane[1:2, :]
    return jnp.maximum(y, 0.0) if relu else y


def _fill_h_padded(pad_ref, interior_bf16, h):
    """Zero the two H-halo rows (full-lane stores) and copy the interior."""
    n, _, lanes = pad_ref.shape
    z = jnp.zeros((n, 1, lanes), pad_ref.dtype)
    pad_ref[:, 0:1, :] = z                       # top halo row
    pad_ref[:, h + 1:h + 2, :] = z               # bottom halo row
    pad_ref[:, 1:h + 1, :] = interior_bf16       # interior (cast done by caller)


def _conv3x3_rows(pad_ref, b_ref, r, h, lanes_in):
    """3x3 'SAME' conv as three accumulating MXU matmuls (one per dh tap row)."""
    acc = None
    for dh in range(3):
        slab = pad_ref[:, dh:dh + h, :].reshape(r, lanes_in)
        t = jnp.dot(slab, b_ref[dh], preferred_element_type=jnp.float32)
        acc = t if acc is None else acc + t
    return acc


# ----------------------------------------------------------------------------
# Kernel
# ----------------------------------------------------------------------------
def _basic_block_kernel(x_ref, b1_ref, b2_ref, bsc_ref, gamma_ref, beta_ref,
                        o_ref, xpad_ref, ypad_ref, *, n, h, w, cin, cout):
    r = n * h                      # rows of the lane-dense layout: (n, h)
    m = n * h * w                  # elements per channel for BN statistics
    mxu_dt = xpad_ref.dtype        # bf16 MXU operands, f32 accumulation

    fold, tile = _channel_fold_tile(w, cout)

    # -------- H-pad the input inside VMEM (bf16, halo rows only) -------------
    _fill_h_padded(xpad_ref, x_ref[...].astype(mxu_dt), h)

    # -------- conv1: three accumulating matmuls against banded weights --------
    acc1 = _conv3x3_rows(xpad_ref, b1_ref, r, h, w * cin)              # (R, W*Cout)

    # bn1 + ReLU (lane dense)
    out1 = _bn_lane_dense(acc1, gamma_ref[0:1, :], beta_ref[0:1, :],
                          fold, tile, m, relu=True)

    # -------- H-pad bn1 output (bf16) for conv2 -------------------------------
    _fill_h_padded(ypad_ref, out1.reshape(n, h, w * cout).astype(mxu_dt), h)

    # -------- conv2 ------------------------------------------------------------
    acc2 = _conv3x3_rows(ypad_ref, b2_ref, r, h, w * cout)
    out2 = _bn_lane_dense(acc2, gamma_ref[1:2, :], beta_ref[1:2, :],
                          fold, tile, m, relu=False)

    # -------- shortcut: 1x1 conv (block-diag weights) + bn ---------------------
    # Reuse the bf16 interior of xpad (== x cast once) as the matmul operand.
    xs = xpad_ref[:, 1:h + 1, :].reshape(r, w * cin)
    sc = jnp.dot(xs, bsc_ref[...], preferred_element_type=jnp.float32)
    sc = _bn_lane_dense(sc, gamma_ref[2:3, :], beta_ref[2:3, :],
                        fold, tile, m, relu=False)

    # -------- residual add + ReLU; fully lane-dense (R, W*Cout) store ----------
    o_ref[...] = jnp.maximum(out2 + sc, 0.0).astype(o_ref.dtype)


# ----------------------------------------------------------------------------
# Wrapper-side weight preparation (banded / block-diagonal matrices)
# ----------------------------------------------------------------------------
def _banded_conv_weights(w_hwio, width):
    """(3,3,Ci,Co) conv weights -> (3, W*Ci, W*Co) stacked banded blocks B[dh]
    such that  sum_dh (row-slab_dh @ B[dh])  equals the 3x3 stride-1 'SAME' conv
    in the lane-dense (rows=(n,h), lanes=(w,c)) layout.  The W-direction zero
    padding is folded into the band structure (eye(W, W, k=1-dw)), so no W halo
    is needed in VMEM."""
    blocks = []
    for dh in range(3):
        b = sum(jnp.kron(jnp.eye(width, width, k=1 - dw, dtype=w_hwio.dtype),
                         w_hwio[dh, dw])
                for dw in range(3))                       # (W*ci, W*co)
        blocks.append(b)
    return jnp.stack(blocks, axis=0)


def basic_block_forward_nhwc(x_nhwc, params, *, mxu_dtype=jnp.bfloat16,
                             out_dtype=jnp.float32):
    """Pallas forward in NHWC (preferred entry point: avoids layout transposes).
    out_dtype=bfloat16 halves HBM writeback for callers that can take bf16.
    NOTE: W*Cout should be a multiple of 128 for fully unmasked output stores
    (correct either way)."""
    w1, w2, wsc, gammas, betas = params
    n, h, w, cin = x_nhwc.shape
    cout = w1.shape[-1]

    b1 = _banded_conv_weights(w1, w).astype(mxu_dtype)                  # (3, W*Cin,  W*Cout)
    b2 = _banded_conv_weights(w2, w).astype(mxu_dtype)                  # (3, W*Cout, W*Cout)
    bsc = jnp.kron(jnp.eye(w, dtype=wsc.dtype), wsc).astype(mxu_dtype)  # (W*Cin, W*Cout)
    x_dense = x_nhwc.reshape(n, h, w * cin)                             # lane-dense view

    kernel = functools.partial(_basic_block_kernel,
                               n=n, h=h, w=w, cin=cin, cout=cout)
    out2d = pl.pallas_call(
        kernel,
        out_shape=jax.ShapeDtypeStruct((n * h, w * cout), out_dtype),
        in_specs=[pl.BlockSpec(memory_space=pltpu.MemorySpace.VMEM)] * 6,
        out_specs=pl.BlockSpec(memory_space=pltpu.MemorySpace.VMEM),
        scratch_shapes=[
            pltpu.VMEM((n, h + 2, w * cin), mxu_dtype),    # H-padded input (bf16)
            pltpu.VMEM((n, h + 2, w * cout), mxu_dtype),   # H-padded bn1/relu out (bf16)
        ],
        compiler_params=pltpu.CompilerParams(vmem_limit_bytes=32 * 1024 * 1024),
    )(x_dense, b1, b2, bsc, gammas, betas)
    return out2d.reshape(n, h, w, cout)


@functools.partial(jax.jit, static_argnames=("mxu_dtype",))
def basic_block_forward(x_nchw, params, mxu_dtype=jnp.bfloat16):
    """NCHW (PyTorch layout) wrapper.  The two transposes are kept only for API
    parity with the nn.Module; callers that can supply NHWC should use
    basic_block_forward_nhwc directly and skip the extra HBM round trips."""
    x_nhwc = jnp.transpose(x_nchw, (0, 2, 3, 1))
    out = basic_block_forward_nhwc(x_nhwc, params, mxu_dtype=mxu_dtype)
    return jnp.transpose(out, (0, 3, 1, 2))


# ----------------------------------------------------------------------------
# Pure-JAX reference (PyTorch training-mode BN semantics)
# ----------------------------------------------------------------------------
def basic_block_reference(x_nchw, params, conv_dtype=jnp.float32):
    """conv_dtype=bfloat16 mirrors the kernel's MXU operand dtype (f32 accum)
    for a tight numerical comparison; float32 gives the exact module semantics
    for a (necessarily looser, bf16-vs-f32) sanity check."""
    w1, w2, wsc, gammas, betas = params
    cin, cout = wsc.shape
    x = jnp.transpose(x_nchw, (0, 2, 3, 1))

    def conv(a, wgt):
        return lax.conv_general_dilated(
            a.astype(conv_dtype), wgt.astype(conv_dtype), (1, 1), 'SAME',
            dimension_numbers=('NHWC', 'HWIO', 'NHWC'),
            preferred_element_type=jnp.float32,
            precision=lax.Precision.HIGHEST)

    def bn(a, g, b):
        mean = jnp.mean(a, axis=(0, 1, 2), keepdims=True)
        var = jnp.mean((a - mean) ** 2, axis=(0, 1, 2), keepdims=True)
        return (a - mean) * lax.rsqrt(var + EPS) * g + b

    out = jax.nn.relu(bn(conv(x, w1), gammas[0], betas[0]))
    out = bn(conv(out, w2), gammas[1], betas[1])
    sc = bn(conv(x, wsc.reshape(1, 1, cin, cout)), gammas[2], betas[2])
    return jnp.transpose(jax.nn.relu(out + sc), (0, 3, 1, 2))


if __name__ == "__main__":
    # batch=2, in_planes=4, planes=8, spatial=16x16, stride=1
    # (in_planes != planes, so the conv+BN shortcut branch is exercised).
    N, Cin, Cout, H, W = 2, 4, 8, 16, 16

    key = jax.random.PRNGKey(0)
    k = jax.random.split(key, 6)
    x = jax.random.normal(k[0], (N, Cin, H, W), dtype=jnp.float32)
    w1 = 0.1 * jax.random.normal(k[1], (3, 3, Cin, Cout), dtype=jnp.float32)
    w2 = 0.1 * jax.random.normal(k[2], (3, 3, Cout, Cout), dtype=jnp.float32)
    wsc = 0.1 * jax.random.normal(k[3], (Cin, Cout), dtype=jnp.float32)
    gammas = jax.random.uniform(k[4], (3, Cout), jnp.float32, 0.5, 1.5)  # bn1, bn2, bn_sc
    betas = 0.1 * jax.random.normal(k[5], (3, Cout), dtype=jnp.float32)
    params = (w1, w2, wsc, gammas, betas)

    out = jax.block_until_ready(basic_block_forward(x, params))
    assert out.shape == (N, Cout, H, W), out.shape
    o = np.asarray(out)

    # Tight check against a reference with matching bf16 MXU operands.
    ref_bf16 = np.asarray(jax.block_until_ready(
        basic_block_reference(x, params, conv_dtype=jnp.bfloat16)))
    if not np.allclose(o, ref_bf16, atol=1e-2, rtol=1e-2):
        raise AssertionError(
            "mismatch vs bf16-matched reference, max |diff|=%e"
            % float(np.max(np.abs(o - ref_bf16))))

    # Loose semantic check against the pure-f32 PyTorch-style reference
    # (difference budget comes from bf16 MXU operands in the kernel).
    ref_f32 = np.asarray(jax.block_until_ready(
        basic_block_reference(x, params, conv_dtype=jnp.float32)))
    if not np.allclose(o, ref_f32, atol=2e-1, rtol=5e-2):
        raise AssertionError(
            "mismatch vs f32 reference, max |diff|=%e"
            % float(np.max(np.abs(o - ref_f32))))

    print("KERNEL_OK")
</pallas_src>

<mosaic_0001>
module attributes {stable_mosaic.version = 11 : i64} {
  func.func @_basic_block_kernel(%arg0: memref<2x16x64xf32, #tpu.memory_space<vmem>>, %arg1: memref<3x64x128xbf16, #tpu.memory_space<vmem>>, %arg2: memref<3x128x128xbf16, #tpu.memory_space<vmem>>, %arg3: memref<64x128xbf16, #tpu.memory_space<vmem>>, %arg4: memref<3x8xf32, #tpu.memory_space<vmem>>, %arg5: memref<3x8xf32, #tpu.memory_space<vmem>>, %arg6: memref<32x128xf32, #tpu.memory_space<vmem>>, %arg7: memref<2x18x64xbf16, #tpu.memory_space<vmem>>, %arg8: memref<2x18x128xbf16, #tpu.memory_space<vmem>>) attributes {dimension_semantics = [], scalar_prefetch = 0 : i64, scratch_operands = 2 : i64, tpu.core_type = #tpu.core_type<tc>} {
    %0 = tpu.iota {dimensions = array<i32: 0>} : vector<128x8xi32>
    %1 = tpu.iota {dimensions = array<i32: 1>} : vector<128x8xi32>
    %c8_i32 = arith.constant 8 : i32
    %c0_i32 = arith.constant 0 : i32
    %2 = arith.cmpi eq, %c8_i32, %c0_i32 : i32
    %c1_i32 = arith.constant 1 : i32
    %3 = arith.select %2, %c1_i32, %c8_i32 : i32
    %4 = vector.broadcast %3 : i32 to vector<128x8xi32>
    %5 = arith.remsi %0, %4 : vector<128x8xi32>
    %c0_i32_0 = arith.constant 0 : i32
    %6 = vector.broadcast %c0_i32_0 : i32 to vector<128x8xi32>
    %7 = arith.cmpi ne, %5, %6 : vector<128x8xi32>
    %c0_i32_1 = arith.constant 0 : i32
    %8 = vector.broadcast %c0_i32_1 : i32 to vector<128x8xi32>
    %9 = arith.cmpi slt, %5, %8 : vector<128x8xi32>
    %c0_i32_2 = arith.constant 0 : i32
    %10 = arith.cmpi slt, %3, %c0_i32_2 : i32
    %11 = vector.broadcast %10 : i1 to vector<128x8xi1>
    %12 = vector.broadcast %11 : vector<128x8xi1> to vector<128x8xi1>
    %13 = arith.xori %9, %12 : vector<128x8xi1>
    %14 = arith.andi %13, %7 : vector<128x8xi1>
    %15 = vector.broadcast %3 : i32 to vector<128x8xi32>
    %16 = arith.addi %5, %15 : vector<128x8xi32>
    %17 = arith.select %14, %16, %5 : vector<128x8xi1>, vector<128x8xi32>
    %18 = arith.cmpi eq, %17, %1 : vector<128x8xi32>
    %19 = arith.extui %18 : vector<128x8xi1> to vector<128x8xi32>
    %20 = arith.sitofp %19 : vector<128x8xi32> to vector<128x8xf32>
    %21 = tpu.iota {dimensions = array<i32: 1>} : vector<8x128xi32>
    %22 = tpu.iota {dimensions = array<i32: 0>} : vector<8x128xi32>
    %c8_i32_3 = arith.constant 8 : i32
    %c0_i32_4 = arith.constant 0 : i32
    %23 = arith.cmpi eq, %c8_i32_3, %c0_i32_4 : i32
    %c1_i32_5 = arith.constant 1 : i32
    %24 = arith.select %23, %c1_i32_5, %c8_i32_3 : i32
    %25 = vector.broadcast %24 : i32 to vector<8x128xi32>
    %26 = arith.remsi %21, %25 : vector<8x128xi32>
    %c0_i32_6 = arith.constant 0 : i32
    %27 = vector.broadcast %c0_i32_6 : i32 to vector<8x128xi32>
    %28 = arith.cmpi ne, %26, %27 : vector<8x128xi32>
    %c0_i32_7 = arith.constant 0 : i32
    %29 = vector.broadcast %c0_i32_7 : i32 to vector<8x128xi32>
    %30 = arith.cmpi slt, %26, %29 : vector<8x128xi32>
    %c0_i32_8 = arith.constant 0 : i32
    %31 = arith.cmpi slt, %24, %c0_i32_8 : i32
    %32 = vector.broadcast %31 : i1 to vector<8x128xi1>
    %33 = vector.broadcast %32 : vector<8x128xi1> to vector<8x128xi1>
    %34 = arith.xori %30, %33 : vector<8x128xi1>
    %35 = arith.andi %34, %28 : vector<8x128xi1>
    %36 = vector.broadcast %24 : i32 to vector<8x128xi32>
    %37 = arith.addi %26, %36 : vector<8x128xi32>
    %38 = arith.select %35, %37, %26 : vector<8x128xi1>, vector<8x128xi32>
    %39 = arith.cmpi eq, %38, %22 : vector<8x128xi32>
    %40 = arith.extui %39 : vector<8x128xi1> to vector<8x128xi32>
    %41 = arith.sitofp %40 : vector<8x128xi32> to vector<8x128xf32>
    %c0 = arith.constant 0 : index
    %c0_9 = arith.constant 0 : index
    %c0_10 = arith.constant 0 : index
    %42 = vector.load %arg0[%c0, %c0_9, %c0_10] : memref<2x16x64xf32, #tpu.memory_space<vmem>>, vector<2x16x64xf32>
    %43 = arith.truncf %42 : vector<2x16x64xf32> to vector<2x16x64xbf16>
    %cst = arith.constant 0.000000e+00 : bf16
    %44 = vector.broadcast %cst : bf16 to vector<2x1x64xbf16>
    %c0_11 = arith.constant 0 : index
    %c0_12 = arith.constant 0 : index
    %c0_13 = arith.constant 0 : index
    %45 = vector.load %arg7[%c0_11, %c0_12, %c0_13] : memref<2x18x64xbf16, #tpu.memory_space<vmem>>, vector<2x1x64xbf16>
    tpu.vector_store %arg7[%c0_11, %c0_12, %c0_13], %44 {strides = array<i32>} : memref<2x18x64xbf16, #tpu.memory_space<vmem>>, vector<2x1x64xbf16>,
    %c0_14 = arith.constant 0 : index
    %c17 = arith.constant 17 : index
    %c0_15 = arith.constant 0 : index
    %46 = vector.load %arg7[%c0_14, %c17, %c0_15] : memref<2x18x64xbf16, #tpu.memory_space<vmem>>, vector<2x1x64xbf16>
    tpu.vector_store %arg7[%c0_14, %c17, %c0_15], %44 {strides = array<i32>} : memref<2x18x64xbf16, #tpu.memory_space<vmem>>, vector<2x1x64xbf16>,
    %c0_16 = arith.constant 0 : index
    %c1 = arith.constant 1 : index
    %c0_17 = arith.constant 0 : index
    %47 = vector.load %arg7[%c0_16, %c1, %c0_17] : memref<2x18x64xbf16, #tpu.memory_space<vmem>>, vector<2x16x64xbf16>
    tpu.vector_store %arg7[%c0_16, %c1, %c0_17], %43 {strides = array<i32>} : memref<2x18x64xbf16, #tpu.memory_space<vmem>>, vector<2x16x64xbf16>,
    %c0_18 = arith.constant 0 : index
    %c0_19 = arith.constant 0 : index
    %c0_20 = arith.constant 0 : index
    %48 = vector.load %arg7[%c0_18, %c0_19, %c0_20] : memref<2x18x64xbf16, #tpu.memory_space<vmem>>, vector<2x16x64xbf16>
    %49 = vector.shape_cast %48 : vector<2x16x64xbf16> to vector<32x64xbf16>
    %c0_21 = arith.constant 0 : index
    %c0_22 = arith.constant 0 : index
    %c0_23 = arith.constant 0 : index
    %50 = vector.load %arg1[%c0_21, %c0_22, %c0_23] : memref<3x64x128xbf16, #tpu.memory_space<vmem>>, vector<1x64x128xbf16>
    %51 = vector.shape_cast %50 : vector<1x64x128xbf16> to vector<64x128xbf16>
    %cst_24 = arith.constant dense<0.000000e+00> : vector<32x128xf32>
    %52 = tpu.matmul %49, %51, %cst_24 {dimension_numbers = #tpu.dot_dimension_numbers<[1], [0], [0], [1], [0, 0, 1, 1], [], []>} : vector<32x64xbf16>, vector<64x128xbf16>, vector<32x128xf32> -> vector<32x128xf32>
    %c0_25 = arith.constant 0 : index
    %c1_26 = arith.constant 1 : index
    %c0_27 = arith.constant 0 : index
    %53 = vector.load %arg7[%c0_25, %c1_26, %c0_27] : memref<2x18x64xbf16, #tpu.memory_space<vmem>>, vector<2x16x64xbf16>
    %54 = vector.shape_cast %53 : vector<2x16x64xbf16> to vector<32x64xbf16>
    %c1_28 = arith.constant 1 : index
    %c0_29 = arith.constant 0 : index
    %c0_30 = arith.constant 0 : index
    %55 = vector.load %arg1[%c1_28, %c0_29, %c0_30] : memref<3x64x128xbf16, #tpu.memory_space<vmem>>, vector<1x64x128xbf16>
    %56 = vector.shape_cast %55 : vector<1x64x128xbf16> to vector<64x128xbf16>
    %cst_31 = arith.constant dense<0.000000e+00> : vector<32x128xf32>
    %57 = tpu.matmul %54, %56, %cst_31 {dimension_numbers = #tpu.dot_dimension_numbers<[1], [0], [0], [1], [0, 0, 1, 1], [], []>} : vector<32x64xbf16>, vector<64x128xbf16>, vector<32x128xf32> -> vector<32x128xf32>
    %58 = arith.addf %52, %57 : vector<32x128xf32>
    %c0_32 = arith.constant 0 : index
    %c2 = arith.constant 2 : index
    %c0_33 = arith.constant 0 : index
    %59 = vector.load %arg7[%c0_32, %c2, %c0_33] : memref<2x18x64xbf16, #tpu.memory_space<vmem>>, vector<2x16x64xbf16>
    %60 = vector.shape_cast %59 : vector<2x16x64xbf16> to vector<32x64xbf16>
    %c2_34 = arith.constant 2 : index
    %c0_35 = arith.constant 0 : index
    %c0_36 = arith.constant 0 : index
    %61 = vector.load %arg1[%c2_34, %c0_35, %c0_36] : memref<3x64x128xbf16, #tpu.memory_space<vmem>>, vector<1x64x128xbf16>
    %62 = vector.shape_cast %61 : vector<1x64x128xbf16> to vector<64x128xbf16>
    %cst_37 = arith.constant dense<0.000000e+00> : vector<32x128xf32>
    %63 = tpu.matmul %60, %62, %cst_37 {dimension_numbers = #tpu.dot_dimension_numbers<[1], [0], [0], [1], [0, 0, 1, 1], [], []>} : vector<32x64xbf16>, vector<64x128xbf16>, vector<32x128xf32> -> vector<32x128xf32>
    %64 = arith.addf %58, %63 : vector<32x128xf32>
    %c0_38 = arith.constant 0 : index
    %c0_39 = arith.constant 0 : index
    %65 = vector.load %arg4[%c0_38, %c0_39] : memref<3x8xf32, #tpu.memory_space<vmem>>, vector<1x8xf32>
    %c0_40 = arith.constant 0 : index
    %c0_41 = arith.constant 0 : index
    %66 = vector.load %arg5[%c0_40, %c0_41] : memref<3x8xf32, #tpu.memory_space<vmem>>, vector<1x8xf32>
    %cst_42 = arith.constant dense<0.000000e+00> : vector<128xf32>
    %67 = vector.multi_reduction <add>, %64, %cst_42 [0] : vector<32x128xf32> to vector<128xf32>
    %68 = vector.shape_cast %67 : vector<128xf32> to vector<1x128xf32>
    %69 = arith.mulf %64, %64 : vector<32x128xf32>
    %cst_43 = arith.constant dense<0.000000e+00> : vector<128xf32>
    %70 = vector.multi_reduction <add>, %69, %cst_43 [0] : vector<32x128xf32> to vector<128xf32>
    %71 = vector.shape_cast %70 : vector<128xf32> to vector<1x128xf32>
    %72 = tpu.concatenate %68, %71 in 0 : vector<1x128xf32>, vector<1x128xf32> -> vector<2x128xf32>
    %cst_44 = arith.constant dense<0.000000e+00> : vector<2x8xf32>
    %73 = tpu.matmul %72, %20, %cst_44 {dimension_numbers = #tpu.dot_dimension_numbers<[1], [0], [0], [1], [0, 0, 1, 1], [], []>} : vector<2x128xf32>, vector<128x8xf32>, vector<2x8xf32> -> vector<2x8xf32>
    %74 = vector.extract_strided_slice %73 {offsets = [0, 0], sizes = [1, 8], strides = [1, 1]} : vector<2x8xf32> to vector<1x8xf32>
    %cst_45 = arith.constant 0.001953125 : f32
    %75 = vector.broadcast %cst_45 : f32 to vector<1x8xf32>
    %76 = arith.mulf %74, %75 : vector<1x8xf32>
    %77 = vector.extract_strided_slice %73 {offsets = [1, 0], sizes = [1, 8], strides = [1, 1]} : vector<2x8xf32> to vector<1x8xf32>
    %cst_46 = arith.constant 0.001953125 : f32
    %78 = vector.broadcast %cst_46 : f32 to vector<1x8xf32>
    %79 = arith.mulf %77, %78 : vector<1x8xf32>
    %80 = arith.mulf %76, %76 : vector<1x8xf32>
    %81 = arith.subf %79, %80 : vector<1x8xf32>
    %cst_47 = arith.constant 9.99999974E-6 : f32
    %82 = vector.broadcast %cst_47 : f32 to vector<1x8xf32>
    %83 = arith.addf %81, %82 : vector<1x8xf32>
    %84 = math.rsqrt %83 : vector<1x8xf32>
    %85 = arith.mulf %65, %84 : vector<1x8xf32>
    %86 = arith.mulf %76, %85 : vector<1x8xf32>
    %87 = arith.subf %66, %86 : vector<1x8xf32>
    %88 = tpu.concatenate %85, %87 in 0 : vector<1x8xf32>, vector<1x8xf32> -> vector<2x8xf32>
    %cst_48 = arith.constant dense<0.000000e+00> : vector<2x128xf32>
    %89 = tpu.matmul %88, %41, %cst_48 {dimension_numbers = #tpu.dot_dimension_numbers<[1], [0], [0], [1], [0, 0, 1, 1], [], []>} : vector<2x8xf32>, vector<8x128xf32>, vector<2x128xf32> -> vector<2x128xf32>
    %90 = vector.extract_strided_slice %89 {offsets = [0, 0], sizes = [1, 128], strides = [1, 1]} : vector<2x128xf32> to vector<1x128xf32>
    %91 = vector.broadcast %90 : vector<1x128xf32> to vector<32x128xf32>
    %92 = arith.mulf %64, %91 : vector<32x128xf32>
    %93 = vector.extract_strided_slice %89 {offsets = [1, 0], sizes = [1, 128], strides = [1, 1]} : vector<2x128xf32> to vector<1x128xf32>
    %94 = vector.broadcast %93 : vector<1x128xf32> to vector<32x128xf32>
    %95 = arith.addf %92, %94 : vector<32x128xf32>
    %cst_49 = arith.constant 0.000000e+00 : f32
    %96 = vector.broadcast %cst_49 : f32 to vector<32x128xf32>
    %97 = arith.maximumf %95, %96 : vector<32x128xf32>
    %98 = vector.shape_cast %97 : vector<32x128xf32> to vector<2x16x128xf32>
    %99 = arith.truncf %98 : vector<2x16x128xf32> to vector<2x16x128xbf16>
    %cst_50 = arith.constant 0.000000e+00 : bf16
    %100 = vector.broadcast %cst_50 : bf16 to vector<2x1x128xbf16>
    %c0_51 = arith.constant 0 : index
    %c0_52 = arith.constant 0 : index
    %c0_53 = arith.constant 0 : index
    %101 = vector.load %arg8[%c0_51, %c0_52, %c0_53] : memref<2x18x128xbf16, #tpu.memory_space<vmem>>, vector<2x1x128xbf16>
    tpu.vector_store %arg8[%c0_51, %c0_52, %c0_53], %100 {strides = array<i32>} : memref<2x18x128xbf16, #tpu.memory_space<vmem>>, vector<2x1x128xbf16>,
    %c0_54 = arith.constant 0 : index
    %c17_55 = arith.constant 17 : index
    %c0_56 = arith.constant 0 : index
    %102 = vector.load %arg8[%c0_54, %c17_55, %c0_56] : memref<2x18x128xbf16, #tpu.memory_space<vmem>>, vector<2x1x128xbf16>
    tpu.vector_store %arg8[%c0_54, %c17_55, %c0_56], %100 {strides = array<i32>} : memref<2x18x128xbf16, #tpu.memory_space<vmem>>, vector<2x1x128xbf16>,
    %c0_57 = arith.constant 0 : index
    %c1_58 = arith.constant 1 : index
    %c0_59 = arith.constant 0 : index
    %103 = vector.load %arg8[%c0_57, %c1_58, %c0_59] : memref<2x18x128xbf16, #tpu.memory_space<vmem>>, vector<2x16x128xbf16>
    tpu.vector_store %arg8[%c0_57, %c1_58, %c0_59], %99 {strides = array<i32>} : memref<2x18x128xbf16, #tpu.memory_space<vmem>>, vector<2x16x128xbf16>,
    %c0_60 = arith.constant 0 : index
    %c0_61 = arith.constant 0 : index
    %c0_62 = arith.constant 0 : index
    %104 = vector.load %arg8[%c0_60, %c0_61, %c0_62] : memref<2x18x128xbf16, #tpu.memory_space<vmem>>, vector<2x16x128xbf16>
    %105 = vector.shape_cast %104 : vector<2x16x128xbf16> to vector<32x128xbf16>
    %c0_63 = arith.constant 0 : index
    %c0_64 = arith.constant 0 : index
    %c0_65 = arith.constant 0 : index
    %106 = vector.load %arg2[%c0_63, %c0_64, %c0_65] : memref<3x128x128xbf16, #tpu.memory_space<vmem>>, vector<1x128x128xbf16>
    %107 = vector.shape_cast %106 : vector<1x128x128xbf16> to vector<128x128xbf16>
    %cst_66 = arith.constant dense<0.000000e+00> : vector<32x128xf32>
    %108 = tpu.matmul %105, %107, %cst_66 {dimension_numbers = #tpu.dot_dimension_numbers<[1], [0], [0], [1], [0, 0, 1, 1], [], []>} : vector<32x128xbf16>, vector<128x128xbf16>, vector<32x128xf32> -> vector<32x128xf32>
    %c0_67 = arith.constant 0 : index
    %c1_68 = arith.constant 1 : index
    %c0_69 = arith.constant 0 : index
    %109 = vector.load %arg8[%c0_67, %c1_68, %c0_69] : memref<2x18x128xbf16, #tpu.memory_space<vmem>>, vector<2x16x128xbf16>
    %110 = vector.shape_cast %109 : vector<2x16x128xbf16> to vector<32x128xbf16>
    %c1_70 = arith.constant 1 : index
    %c0_71 = arith.constant 0 : index
    %c0_72 = arith.constant 0 : index
    %111 = vector.load %arg2[%c1_70, %c0_71, %c0_72] : memref<3x128x128xbf16, #tpu.memory_space<vmem>>, vector<1x128x128xbf16>
    %112 = vector.shape_cast %111 : vector<1x128x128xbf16> to vector<128x128xbf16>
    %cst_73 = arith.constant dense<0.000000e+00> : vector<32x128xf32>
    %113 = tpu.matmul %110, %112, %cst_73 {dimension_numbers = #tpu.dot_dimension_numbers<[1], [0], [0], [1], [0, 0, 1, 1], [], []>} : vector<32x128xbf16>, vector<128x128xbf16>, vector<32x128xf32> -> vector<32x128xf32>
    %114 = arith.addf %108, %113 : vector<32x128xf32>
    %c0_74 = arith.constant 0 : index
    %c2_75 = arith.constant 2 : index
    %c0_76 = arith.constant 0 : index
    %115 = vector.load %arg8[%c0_74, %c2_75, %c0_76] : memref<2x18x128xbf16, #tpu.memory_space<vmem>>, vector<2x16x128xbf16>
    %116 = vector.shape_cast %115 : vector<2x16x128xbf16> to vector<32x128xbf16>
    %c2_77 = arith.constant 2 : index
    %c0_78 = arith.constant 0 : index
    %c0_79 = arith.constant 0 : index
    %117 = vector.load %arg2[%c2_77, %c0_78, %c0_79] : memref<3x128x128xbf16, #tpu.memory_space<vmem>>, vector<1x128x128xbf16>
    %118 = vector.shape_cast %117 : vector<1x128x128xbf16> to vector<128x128xbf16>
    %cst_80 = arith.constant dense<0.000000e+00> : vector<32x128xf32>
    %119 = tpu.matmul %116, %118, %cst_80 {dimension_numbers = #tpu.dot_dimension_numbers<[1], [0], [0], [1], [0, 0, 1, 1], [], []>} : vector<32x128xbf16>, vector<128x128xbf16>, vector<32x128xf32> -> vector<32x128xf32>
    %120 = arith.addf %114, %119 : vector<32x128xf32>
    %c1_81 = arith.constant 1 : index
    %c0_82 = arith.constant 0 : index
    %121 = vector.load %arg4[%c1_81, %c0_82] : memref<3x8xf32, #tpu.memory_space<vmem>>, vector<1x8xf32>
    %c1_83 = arith.constant 1 : index
    %c0_84 = arith.constant 0 : index
    %122 = vector.load %arg5[%c1_83, %c0_84] : memref<3x8xf32, #tpu.memory_space<vmem>>, vector<1x8xf32>
    %cst_85 = arith.constant dense<0.000000e+00> : vector<128xf32>
    %123 = vector.multi_reduction <add>, %120, %cst_85 [0] : vector<32x128xf32> to vector<128xf32>
    %124 = vector.shape_cast %123 : vector<128xf32> to vector<1x128xf32>
    %125 = arith.mulf %120, %120 : vector<32x128xf32>
    %cst_86 = arith.constant dense<0.000000e+00> : vector<128xf32>
    %126 = vector.multi_reduction <add>, %125, %cst_86 [0] : vector<32x128xf32> to vector<128xf32>
    %127 = vector.shape_cast %126 : vector<128xf32> to vector<1x128xf32>
    %128 = tpu.concatenate %124, %127 in 0 : vector<1x128xf32>, vector<1x128xf32> -> vector<2x128xf32>
    %cst_87 = arith.constant dense<0.000000e+00> : vector<2x8xf32>
    %129 = tpu.matmul %128, %20, %cst_87 {dimension_numbers = #tpu.dot_dimension_numbers<[1], [0], [0], [1], [0, 0, 1, 1], [], []>} : vector<2x128xf32>, vector<128x8xf32>, vector<2x8xf32> -> vector<2x8xf32>
    %130 = vector.extract_strided_slice %129 {offsets = [0, 0], sizes = [1, 8], strides = [1, 1]} : vector<2x8xf32> to vector<1x8xf32>
    %cst_88 = arith.constant 0.001953125 : f32
    %131 = vector.broadcast %cst_88 : f32 to vector<1x8xf32>
    %132 = arith.mulf %130, %131 : vector<1x8xf32>
    %133 = vector.extract_strided_slice %129 {offsets = [1, 0], sizes = [1, 8], strides = [1, 1]} : vector<2x8xf32> to vector<1x8xf32>
    %cst_89 = arith.constant 0.001953125 : f32
    %134 = vector.broadcast %cst_89 : f32 to vector<1x8xf32>
    %135 = arith.mulf %133, %134 : vector<1x8xf32>
    %136 = arith.mulf %132, %132 : vector<1x8xf32>
    %137 = arith.subf %135, %136 : vector<1x8xf32>
    %cst_90 = arith.constant 9.99999974E-6 : f32
    %138 = vector.broadcast %cst_90 : f32 to vector<1x8xf32>
    %139 = arith.addf %137, %138 : vector<1x8xf32>
    %140 = math.rsqrt %139 : vector<1x8xf32>
    %141 = arith.mulf %121, %140 : vector<1x8xf32>
    %142 = arith.mulf %132, %141 : vector<1x8xf32>
    %143 = arith.subf %122, %142 : vector<1x8xf32>
    %144 = tpu.concatenate %141, %143 in 0 : vector<1x8xf32>, vector<1x8xf32> -> vector<2x8xf32>
    %cst_91 = arith.constant dense<0.000000e+00> : vector<2x128xf32>
    %145 = tpu.matmul %144, %41, %cst_91 {dimension_numbers = #tpu.dot_dimension_numbers<[1], [0], [0], [1], [0, 0, 1, 1], [], []>} : vector<2x8xf32>, vector<8x128xf32>, vector<2x128xf32> -> vector<2x128xf32>
    %146 = vector.extract_strided_slice %145 {offsets = [0, 0], sizes = [1, 128], strides = [1, 1]} : vector<2x128xf32> to vector<1x128xf32>
    %147 = vector.broadcast %146 : vector<1x128xf32> to vector<32x128xf32>
    %148 = arith.mulf %120, %147 : vector<32x128xf32>
    %149 = vector.extract_strided_slice %145 {offsets = [1, 0], sizes = [1, 128], strides = [1, 1]} : vector<2x128xf32> to vector<1x128xf32>
    %150 = vector.broadcast %149 : vector<1x128xf32> to vector<32x128xf32>
    %151 = arith.addf %148, %150 : vector<32x128xf32>
    %c0_92 = arith.constant 0 : index
    %c1_93 = arith.constant 1 : index
    %c0_94 = arith.constant 0 : index
    %152 = vector.load %arg7[%c0_92, %c1_93, %c0_94] : memref<2x18x64xbf16, #tpu.memory_space<vmem>>, vector<2x16x64xbf16>
    %153 = vector.shape_cast %152 : vector<2x16x64xbf16> to vector<32x64xbf16>
    %c0_95 = arith.constant 0 : index
    %c0_96 = arith.constant 0 : index
    %154 = vector.load %arg3[%c0_95, %c0_96] : memref<64x128xbf16, #tpu.memory_space<vmem>>, vector<64x128xbf16>
    %cst_97 = arith.constant dense<0.000000e+00> : vector<32x128xf32>
    %155 = tpu.matmul %153, %154, %cst_97 {dimension_numbers = #tpu.dot_dimension_numbers<[1], [0], [0], [1], [0, 0, 1, 1], [], []>} : vector<32x64xbf16>, vector<64x128xbf16>, vector<32x128xf32> -> vector<32x128xf32>
    %c2_98 = arith.constant 2 : index
    %c0_99 = arith.constant 0 : index
    %156 = vector.load %arg4[%c2_98, %c0_99] : memref<3x8xf32, #tpu.memory_space<vmem>>, vector<1x8xf32>
    %c2_100 = arith.constant 2 : index
    %c0_101 = arith.constant 0 : index
    %157 = vector.load %arg5[%c2_100, %c0_101] : memref<3x8xf32, #tpu.memory_space<vmem>>, vector<1x8xf32>
    %cst_102 = arith.constant dense<0.000000e+00> : vector<128xf32>
    %158 = vector.multi_reduction <add>, %155, %cst_102 [0] : vector<32x128xf32> to vector<128xf32>
    %159 = vector.shape_cast %158 : vector<128xf32> to vector<1x128xf32>
    %160 = arith.mulf %155, %155 : vector<32x128xf32>
    %cst_103 = arith.constant dense<0.000000e+00> : vector<128xf32>
    %161 = vector.multi_reduction <add>, %160, %cst_103 [0] : vector<32x128xf32> to vector<128xf32>
    %162 = vector.shape_cast %161 : vector<128xf32> to vector<1x128xf32>
    %163 = tpu.concatenate %159, %162 in 0 : vector<1x128xf32>, vector<1x128xf32> -> vector<2x128xf32>
    %cst_104 = arith.constant dense<0.000000e+00> : vector<2x8xf32>
    %164 = tpu.matmul %163, %20, %cst_104 {dimension_numbers = #tpu.dot_dimension_numbers<[1], [0], [0], [1], [0, 0, 1, 1], [], []>} : vector<2x128xf32>, vector<128x8xf32>, vector<2x8xf32> -> vector<2x8xf32>
    %165 = vector.extract_strided_slice %164 {offsets = [0, 0], sizes = [1, 8], strides = [1, 1]} : vector<2x8xf32> to vector<1x8xf32>
    %cst_105 = arith.constant 0.001953125 : f32
    %166 = vector.broadcast %cst_105 : f32 to vector<1x8xf32>
    %167 = arith.mulf %165, %166 : vector<1x8xf32>
    %168 = vector.extract_strided_slice %164 {offsets = [1, 0], sizes = [1, 8], strides = [1, 1]} : vector<2x8xf32> to vector<1x8xf32>
    %cst_106 = arith.constant 0.001953125 : f32
    %169 = vector.broadcast %cst_106 : f32 to vector<1x8xf32>
    %170 = arith.mulf %168, %169 : vector<1x8xf32>
    %171 = arith.mulf %167, %167 : vector<1x8xf32>
    %172 = arith.subf %170, %171 : vector<1x8xf32>
    %cst_107 = arith.constant 9.99999974E-6 : f32
    %173 = vector.broadcast %cst_107 : f32 to vector<1x8xf32>
    %174 = arith.addf %172, %173 : vector<1x8xf32>
    %175 = math.rsqrt %174 : vector<1x8xf32>
    %176 = arith.mulf %156, %175 : vector<1x8xf32>
    %177 = arith.mulf %167, %176 : vector<1x8xf32>
    %178 = arith.subf %157, %177 : vector<1x8xf32>
    %179 = tpu.concatenate %176, %178 in 0 : vector<1x8xf32>, vector<1x8xf32> -> vector<2x8xf32>
    %cst_108 = arith.constant dense<0.000000e+00> : vector<2x128xf32>
    %180 = tpu.matmul %179, %41, %cst_108 {dimension_numbers = #tpu.dot_dimension_numbers<[1], [0], [0], [1], [0, 0, 1, 1], [], []>} : vector<2x8xf32>, vector<8x128xf32>, vector<2x128xf32> -> vector<2x128xf32>
    %181 = vector.extract_strided_slice %180 {offsets = [0, 0], sizes = [1, 128], strides = [1, 1]} : vector<2x128xf32> to vector<1x128xf32>
    %182 = vector.broadcast %181 : vector<1x128xf32> to vector<32x128xf32>
    %183 = arith.mulf %155, %182 : vector<32x128xf32>
    %184 = vector.extract_strided_slice %180 {offsets = [1, 0], sizes = [1, 128], strides = [1, 1]} : vector<2x128xf32> to vector<1x128xf32>
    %185 = vector.broadcast %184 : vector<1x128xf32> to vector<32x128xf32>
    %186 = arith.addf %183, %185 : vector<32x128xf32>
    %187 = arith.addf %151, %186 : vector<32x128xf32>
    %cst_109 = arith.constant 0.000000e+00 : f32
    %188 = vector.broadcast %cst_109 : f32 to vector<32x128xf32>
    %189 = arith.maximumf %187, %188 : vector<32x128xf32>
    %c0_110 = arith.constant 0 : index
    %c0_111 = arith.constant 0 : index
    %190 = vector.load %arg6[%c0_110, %c0_111] : memref<32x128xf32, #tpu.memory_space<vmem>>, vector<32x128xf32>
    tpu.vector_store %arg6[%c0_110, %c0_111], %189 {strides = array<i32>} : memref<32x128xf32, #tpu.memory_space<vmem>>, vector<32x128xf32>,
    return
  }
}

</mosaic_0001>

<llo_original>
// kernel: basic_block_forward.1
$region0: #{basic_block_forward.1}
  #allocation0 [shape = 'u32[]', space=smem, size = 0x4, offset = 0x4, fixed_abs, tag = 'smem constant byte address 0x4 - core index']
  #allocation1 [shape = 'u32[72,128]{1,0:T(1,128)}', space=vmem, size = 0x9000, scoped, tag = 'internal scratch']
  #allocation2 [shape = 'bf16[2,18,64]{2,1,0:T(8,128)(2,1)}', space=vmem, size = 0x3000, scoped, tag = 'scratch operand']
  #allocation3 [shape = 'bf16[2,18,128]{2,1,0:T(8,128)(2,1)}', space=vmem, size = 0x3000, scoped, tag = 'scratch operand']
  %s0 = inlined_call_operand.vmem [shape: f32[2,16,64], index: 0, kind: input, shape index: {}]
  %s1 = inlined_call_operand.vmem [shape: bf16[3,64,128], index: 1, kind: input, shape index: {}]
  %s2 = inlined_call_operand.vmem [shape: bf16[3,128,128], index: 2, kind: input, shape index: {}]
  %s3 = inlined_call_operand.vmem [shape: bf16[64,128], index: 3, kind: input, shape index: {}]
  %s4 = inlined_call_operand.vmem [shape: f32[3,8], index: 4, kind: input, shape index: {}]
  %s5 = inlined_call_operand.vmem [shape: f32[3,8], index: 5, kind: input, shape index: {}]
  %s6 = inlined_call_operand.vmem [shape: f32[32,128], index: 6, kind: output, shape index: {}]
  %s7 = sld [smem:[#allocation0]]
  $region34: #{basic_block_forward.1} parent=0
    _
  %s9 = ssub.s32 1, %s7
  %s10 = scalar_select 0, %s9, %s7
  // Predicated region
  $region2: #{basic_block_forward.1} parent=0 // pred_check
    _
  $region3: #{basic_block_forward.1} parent=0 // pred_check_branch
    %12 = sbr.rel (0) target = $region5
  $region4: #{basic_block_forward.1} parent=0 // pred_region
    _
  $region5: #{basic_block_forward.1} parent=0 // pred_fallthru
    _
  // Predicated region
  $region6: #{basic_block_forward.1} parent=0 // pred_check
    _
  $region7: #{basic_block_forward.1} parent=0 // pred_check_branch
    %14 = sbr.rel (0) target = $region9
  $region8: #{basic_block_forward.1} parent=0 // pred_region
    _
  $region9: #{basic_block_forward.1} parent=0 // pred_fallthru
    _
  // Predicated region
  $region10: #{basic_block_forward.1} parent=0 // pred_check
    _
  $region11: #{basic_block_forward.1} parent=0 // pred_check_branch
    %16 = sbr.rel (0) target = $region13
  $region12: #{basic_block_forward.1} parent=0 // pred_region
    _
  $region13: #{basic_block_forward.1} parent=0 // pred_fallthru
    _
  // Predicated region
  $region14: #{basic_block_forward.1} parent=0 // pred_check
    _
  $region15: #{basic_block_forward.1} parent=0 // pred_check_branch
    %18 = sbr.rel (0) target = $region17
  $region16: #{basic_block_forward.1} parent=0 // pred_region
    _
  $region17: #{basic_block_forward.1} parent=0 // pred_fallthru
    _
  // Predicated region
  $region18: #{basic_block_forward.1} parent=0 // pred_check
    _
  $region19: #{basic_block_forward.1} parent=0 // pred_check_branch
    %20 = sbr.rel (0) target = $region21
  $region20: #{basic_block_forward.1} parent=0 // pred_region
    _
  $region21: #{basic_block_forward.1} parent=0 // pred_fallthru
    _
  // Predicated region
  $region22: #{basic_block_forward.1} parent=0 // pred_check
    _
  $region23: #{basic_block_forward.1} parent=0 // pred_check_branch
    %22 = sbr.rel (0) target = $region25
  $region24: #{basic_block_forward.1} parent=0 // pred_region
    _
  $region25: #{basic_block_forward.1} parent=0 // pred_fallthru
    _
  %v24 = vlaneseq
  %v25 = vshrl.u32 %v24, 7
  %v26 = vadd.s32 %v25, 8
  %v27 = vadd.s32 %v25, 16
  %v28 = vadd.s32 %v25, 24
  %v29 = vadd.s32 %v25, 32
  %v30 = vadd.s32 %v25, 40
  %v31 = vadd.s32 %v25, 48
  %v32 = vadd.s32 %v25, 56
  %v33 = vadd.s32 %v25, 64
  %v34 = vadd.s32 %v25, 72
  %v35 = vadd.s32 %v25, 80
  %v36 = vadd.s32 %v25, 88
  %v37 = vadd.s32 %v25, 96
  %v38 = vadd.s32 %v25, 104
  %v39 = vadd.s32 %v25, 112
  %v40 = vadd.s32 %v25, 120
  %v41 = vlaneseq
  %v42 = vand.u32 %v41, 127
  %vm43 = vcmp.lt.s32.totalorder %v25, 0
  %v44 = vsub.s32 0, %v25
  %v45 = vsel %vm43, %v44, %v25
  %v46 = vshrl.u32 %v45, 3
  %v47 = vand.u32 %v45, 7
  %v48 = vsub.s32 0, %v47
  %v49 = vsel %vm43, %v48, %v47
  %vm50 = vcmp.lt.s32.totalorder %v26, 0
  %v51 = vsub.s32 0, %v26
  %v52 = vsel %vm50, %v51, %v26
  %v53 = vshrl.u32 %v52, 3
  %v54 = vand.u32 %v52, 7
  %v55 = vsub.s32 0, %v54
  %v56 = vsel %vm50, %v55, %v54
  %vm57 = vcmp.lt.s32.totalorder %v27, 0
  %v58 = vsub.s32 0, %v27
  %v59 = vsel %vm57, %v58, %v27
  %v60 = vshrl.u32 %v59, 3
  %v61 = vand.u32 %v59, 7
  %v62 = vsub.s32 0, %v61
  %v63 = vsel %vm57, %v62, %v61
  %vm64 = vcmp.lt.s32.totalorder %v28, 0
  %v65 = vsub.s32 0, %v28
  %v66 = vsel %vm64, %v65, %v28
  %v67 = vshrl.u32 %v66, 3
  %v68 = vand.u32 %v66, 7
  %v69 = vsub.s32 0, %v68
  %v70 = vsel %vm64, %v69, %v68
  %vm71 = vcmp.lt.s32.totalorder %v29, 0
  %v72 = vsub.s32 0, %v29
  %v73 = vsel %vm71, %v72, %v29
  %v74 = vshrl.u32 %v73, 3
  %v75 = vand.u32 %v73, 7
  %v76 = vsub.s32 0, %v75
  %v77 = vsel %vm71, %v76, %v75
  %vm78 = vcmp.lt.s32.totalorder %v30, 0
  %v79 = vsub.s32 0, %v30
  %v80 = vsel %vm78, %v79, %v30
  %v81 = vshrl.u32 %v80, 3
  %v82 = vand.u32 %v80, 7
  %v83 = vsub.s32 0, %v82
  %v84 = vsel %vm78, %v83, %v82
  %vm85 = vcmp.lt.s32.totalorder %v31, 0
  %v86 = vsub.s32 0, %v31
  %v87 = vsel %vm85, %v86, %v31
  %v88 = vshrl.u32 %v87, 3
  %v89 = vand.u32 %v87, 7
  %v90 = vsub.s32 0, %v89
  %v91 = vsel %vm85, %v90, %v89
  %vm92 = vcmp.lt.s32.totalorder %v32, 0
  %v93 = vsub.s32 0, %v32
  %v94 = vsel %vm92, %v93, %v32
  %v95 = vshrl.u32 %v94, 3
  %v96 = vand.u32 %v94, 7
  %v97 = vsub.s32 0, %v96
  %v98 = vsel %vm92, %v97, %v96
  %vm99 = vcmp.lt.s32.totalorder %v33, 0
  %v100 = vsub.s32 0, %v33
  %v101 = vsel %vm99, %v100, %v33
  %v102 = vshrl.u32 %v101, 3
  %v103 = vand.u32 %v101, 7
  %v104 = vsub.s32 0, %v103
  %v105 = vsel %vm99, %v104, %v103
  %vm106 = vcmp.lt.s32.totalorder %v34, 0
  %v107 = vsub.s32 0, %v34
  %v108 = vsel %vm106, %v107, %v34
  %v109 = vshrl.u32 %v108, 3
  %v110 = vand.u32 %v108, 7
  %v111 = vsub.s32 0, %v110
  %v112 = vsel %vm106, %v111, %v110
  %vm113 = vcmp.lt.s32.totalorder %v35, 0
  %v114 = vsub.s32 0, %v35
  %v115 = vsel %vm113, %v114, %v35
  %v116 = vshrl.u32 %v115, 3
  %v117 = vand.u32 %v115, 7
  %v118 = vsub.s32 0, %v117
  %v119 = vsel %vm113, %v118, %v117
  %vm120 = vcmp.lt.s32.totalorder %v36, 0
  %v121 = vsub.s32 0, %v36
  %v122 = vsel %vm120, %v121, %v36
  %v123 = vshrl.u32 %v122, 3
  %v124 = vand.u32 %v122, 7
  %v125 = vsub.s32 0, %v124
  %v126 = vsel %vm120, %v125, %v124
  %vm127 = vcmp.lt.s32.totalorder %v37, 0
  %v128 = vsub.s32 0, %v37
  %v129 = vsel %vm127, %v128, %v37
  %v130 = vshrl.u32 %v129, 3
  %v131 = vand.u32 %v129, 7
  %v132 = vsub.s32 0, %v131
  %v133 = vsel %vm127, %v132, %v131
  %vm134 = vcmp.lt.s32.totalorder %v38, 0
  %v135 = vsub.s32 0, %v38
  %v136 = vsel %vm134, %v135, %v38
  %v137 = vshrl.u32 %v136, 3
  %v138 = vand.u32 %v136, 7
  %v139 = vsub.s32 0, %v138
  %v140 = vsel %vm134, %v139, %v138
  %vm141 = vcmp.lt.s32.totalorder %v39, 0
  %v142 = vsub.s32 0, %v39
  %v143 = vsel %vm141, %v142, %v39
  %v144 = vshrl.u32 %v143, 3
  %v145 = vand.u32 %v143, 7
  %v146 = vsub.s32 0, %v145
  %v147 = vsel %vm141, %v146, %v145
  %vm148 = vcmp.lt.s32.totalorder %v40, 0
  %v149 = vsub.s32 0, %v40
  %v150 = vsel %vm148, %v149, %v40
  %v151 = vshrl.u32 %v150, 3
  %v152 = vand.u32 %v150, 7
  %v153 = vsub.s32 0, %v152
  %v154 = vsel %vm148, %v153, %v152
  %vm155 = vcmp.ne.s32.totalorder %v49, 0
  %vm156 = vcmp.ne.s32.totalorder %v56, 0
  %vm157 = vcmp.ne.s32.totalorder %v63, 0
  %vm158 = vcmp.ne.s32.totalorder %v70, 0
  %vm159 = vcmp.ne.s32.totalorder %v77, 0
  %vm160 = vcmp.ne.s32.totalorder %v84, 0
  %vm161 = vcmp.ne.s32.totalorder %v91, 0
  %vm162 = vcmp.ne.s32.totalorder %v98, 0
  %vm163 = vcmp.ne.s32.totalorder %v105, 0
  %vm164 = vcmp.ne.s32.totalorder %v112, 0
  %vm165 = vcmp.ne.s32.totalorder %v119, 0
  %vm166 = vcmp.ne.s32.totalorder %v126, 0
  %vm167 = vcmp.ne.s32.totalorder %v133, 0
  %vm168 = vcmp.ne.s32.totalorder %v140, 0
  %vm169 = vcmp.ne.s32.totalorder %v147, 0
  %vm170 = vcmp.ne.s32.totalorder %v154, 0
  %vm171 = vcmp.lt.s32.totalorder %v49, 0
  %vm172 = vcmp.lt.s32.totalorder %v56, 0
  %vm173 = vcmp.lt.s32.totalorder %v63, 0
  %vm174 = vcmp.lt.s32.totalorder %v70, 0
  %vm175 = vcmp.lt.s32.totalorder %v77, 0
  %vm176 = vcmp.lt.s32.totalorder %v84, 0
  %vm177 = vcmp.lt.s32.totalorder %v91, 0
  %vm178 = vcmp.lt.s32.totalorder %v98, 0
  %vm179 = vcmp.lt.s32.totalorder %v105, 0
  %vm180 = vcmp.lt.s32.totalorder %v112, 0
  %vm181 = vcmp.lt.s32.totalorder %v119, 0
  %vm182 = vcmp.lt.s32.totalorder %v126, 0
  %vm183 = vcmp.lt.s32.totalorder %v133, 0
  %vm184 = vcmp.lt.s32.totalorder %v140, 0
  %vm185 = vcmp.lt.s32.totalorder %v147, 0
  %vm186 = vcmp.lt.s32.totalorder %v154, 0
  %vm187 = vmand %vm171, %vm155
  %vm188 = vmand %vm172, %vm156
  %vm189 = vmand %vm173, %vm157
  %vm190 = vmand %vm174, %vm158
  %vm191 = vmand %vm175, %vm159
  %vm192 = vmand %vm176, %vm160
  %vm193 = vmand %vm177, %vm161
  %vm194 = vmand %vm178, %vm162
  %vm195 = vmand %vm179, %vm163
  %vm196 = vmand %vm180, %vm164
  %vm197 = vmand %vm181, %vm165
  %vm198 = vmand %vm182, %vm166
  %vm199 = vmand %vm183, %vm167
  %vm200 = vmand %vm184, %vm168
  %vm201 = vmand %vm185, %vm169
  %vm202 = vmand %vm186, %vm170
  %v203 = vadd.s32 %v49, 8
  %v204 = vadd.s32 %v56, 8
  %v205 = vadd.s32 %v63, 8
  %v206 = vadd.s32 %v70, 8
  %v207 = vadd.s32 %v77, 8
  %v208 = vadd.s32 %v84, 8
  %v209 = vadd.s32 %v91, 8
  %v210 = vadd.s32 %v98, 8
  %v211 = vadd.s32 %v105, 8
  %v212 = vadd.s32 %v112, 8
  %v213 = vadd.s32 %v119, 8
  %v214 = vadd.s32 %v126, 8
  %v215 = vadd.s32 %v133, 8
  %v216 = vadd.s32 %v140, 8
  %v217 = vadd.s32 %v147, 8
  %v218 = vadd.s32 %v154, 8
  %v219 = vsel %vm187, %v203, %v49
  %v220 = vsel %vm188, %v204, %v56
  %v221 = vsel %vm189, %v205, %v63
  %v222 = vsel %vm190, %v206, %v70
  %v223 = vsel %vm191, %v207, %v77
  %v224 = vsel %vm192, %v208, %v84
  %v225 = vsel %vm193, %v209, %v91
  %v226 = vsel %vm194, %v210, %v98
  %v227 = vsel %vm195, %v211, %v105
  %v228 = vsel %vm196, %v212, %v112
  %v229 = vsel %vm197, %v213, %v119
  %v230 = vsel %vm198, %v214, %v126
  %v231 = vsel %vm199, %v215, %v133
  %v232 = vsel %vm200, %v216, %v140
  %v233 = vsel %vm201, %v217, %v147
  %v234 = vsel %vm202, %v218, %v154
  %vm235 = vcmp.eq.s32.totalorder %v219, %v42
  %vm236 = vcmp.eq.s32.totalorder %v220, %v42
  %vm237 = vcmp.eq.s32.totalorder %v221, %v42
  %vm238 = vcmp.eq.s32.totalorder %v222, %v42
  %vm239 = vcmp.eq.s32.totalorder %v223, %v42
  %vm240 = vcmp.eq.s32.totalorder %v224, %v42
  %vm241 = vcmp.eq.s32.totalorder %v225, %v42
  %vm242 = vcmp.eq.s32.totalorder %v226, %v42
  %vm243 = vcmp.eq.s32.totalorder %v227, %v42
  %vm244 = vcmp.eq.s32.totalorder %v228, %v42
  %vm245 = vcmp.eq.s32.totalorder %v229, %v42
  %vm246 = vcmp.eq.s32.totalorder %v230, %v42
  %vm247 = vcmp.eq.s32.totalorder %v231, %v42
  %vm248 = vcmp.eq.s32.totalorder %v232, %v42
  %vm249 = vcmp.eq.s32.totalorder %v233, %v42
  %vm250 = vcmp.eq.s32.totalorder %v234, %v42
  %v251 = vsel %vm235, 1, 0
  %v252 = vsel %vm236, 1, 0
  %v253 = vsel %vm237, 1, 0
  %v254 = vsel %vm238, 1, 0
  %v255 = vsel %vm239, 1, 0
  %v256 = vsel %vm240, 1, 0
  %v257 = vsel %vm241, 1, 0
  %v258 = vsel %vm242, 1, 0
  %v259 = vsel %vm243, 1, 0
  %v260 = vsel %vm244, 1, 0
  %v261 = vsel %vm245, 1, 0
  %v262 = vsel %vm246, 1, 0
  %v263 = vsel %vm247, 1, 0
  %v264 = vsel %vm248, 1, 0
  %v265 = vsel %vm249, 1, 0
  %v266 = vsel %vm250, 1, 0
  %v267 = vcvt.s32.f32 %v251
  %v268 = vcvt.s32.f32 %v252
  %v269 = vcvt.s32.f32 %v253
  %v270 = vcvt.s32.f32 %v254
  %v271 = vcvt.s32.f32 %v255
  %v272 = vcvt.s32.f32 %v256
  %v273 = vcvt.s32.f32 %v257
  %v274 = vcvt.s32.f32 %v258
  %v275 = vcvt.s32.f32 %v259
  %v276 = vcvt.s32.f32 %v260
  %v277 = vcvt.s32.f32 %v261
  %v278 = vcvt.s32.f32 %v262
  %v279 = vcvt.s32.f32 %v263
  %v280 = vcvt.s32.f32 %v264
  %v281 = vcvt.s32.f32 %v265
  %v282 = vcvt.s32.f32 %v266
  %vm283 = vcmp.lt.s32.totalorder %v42, 0
  %v284 = vsub.s32 0, %v42
  %v285 = vsel %vm283, %v284, %v42
  %v286 = vshrl.u32 %v285, 3
  %v287 = vand.u32 %v285, 7
  %v288 = vsub.s32 0, %v287
  %v289 = vsel %vm283, %v288, %v287
  %vm290 = vcmp.ne.s32.totalorder %v289, 0
  %vm291 = vcmp.lt.s32.totalorder %v289, 0
  %vm292 = vmand %vm291, %vm290
  %v293 = vadd.s32 %v289, 8
  %v294 = vsel %vm292, %v293, %v289
  %vm295 = vcmp.eq.s32.totalorder %v294, %v25
  %v296 = vsel %vm295, 1, 0
  %v297 = vcvt.s32.f32 %v296
  %v298 = vld [vmem:[%s0] sm:$0xff]
  %v299 = vld [vmem:[%s0 + $0x8] sm:$0xff]
  %v300 = vld [vmem:[%s0 + $0x10] sm:$0xff]
  %v301 = vld [vmem:[%s0 + $0x18] sm:$0xff]
  %v302 = vpack.c.bf16 %v298, %v298
  %v303 = vpack.c.bf16 %v299, %v299
  %v304 = vpack.c.bf16 %v300, %v300
  %v305 = vpack.c.bf16 %v301, %v301
  %vm306 = vcmask 516096
  %vm307 = vsmask.f32 256
  %vm308 = vmand %vm306, %vm307
  %v309 = vld [vmem:[#allocation2] sm:$0x1]
  %v310 = vsel %vm308, 0, %v309
  %311 = vst [vmem:[#allocation2] sm:$0x1] %v310
  %v312 = vld [vmem:[#allocation2 + $0xc] sm:$0x1]
  %v313 = vsel %vm308, 0, %v312
  %314 = vst [vmem:[#allocation2 + $0xc] sm:$0x1] %v313
  %vm315 = vsmask.f32 7938
  %vm316 = vmand %vm306, %vm315
  %v317 = vld [vmem:[#allocation2 + $0x8] sm:$0x1]
  %v318 = vsel %vm316, 0, %v317
  %319 = vst [vmem:[#allocation2 + $0x8] sm:$0x1] %v318
  %v320 = vld [vmem:[#allocation2 + $0x14] sm:$0x1]
  %v321 = vsel %vm316, 0, %v320
  %322 = vst [vmem:[#allocation2 + $0x14] sm:$0x1] %v321
  %vm323 = vsmask.f32 4368
  %vm324 = vmor %vm307, %vm323
  %v326 = vshrl.u32 %v302, 16
  %v328 = vrot.slane %v326, 7
  %v329 = vshll.u32 %v302, 16
  %v331 = vor.u32 %v328, %v329
  %v332 = vrot.slane %v328, 4
  %v334 = vshrl.u32 %v303, 16
  %v336 = vrot.slane %v334, 7
  %v337 = vshll.u32 %v303, 16
  %v339 = vor.u32 %v336, %v337
  %v340 = vsel %vm324, %v332, %v339
  %v341 = vrot.slane %v336, 4
  %v343 = vshrl.u32 %v304, 16
  %v345 = vrot.slane %v343, 7
  %v346 = vshll.u32 %v304, 16
  %v348 = vor.u32 %v345, %v346
  %v349 = vrot.slane %v345, 4
  %v351 = vshrl.u32 %v305, 16
  %v353 = vrot.slane %v351, 7
  %v354 = vshll.u32 %v305, 16
  %v356 = vor.u32 %v353, %v354
  %v357 = vsel %vm324, %v349, %v356
  %v358 = vrot.slane %v353, 4
  %vm365 = vcmask 519168
  %vm366 = vmand %vm365, %vm315
  %v367 = vld [vmem:[#allocation2] sm:$0xf]
  %v368 = vsel %vm366, %v331, %v367
  %369 = vst [vmem:[#allocation2] sm:$0xf] %v368
  %vm370 = vcmask 519168
  %371 = vst.msk [vmem:[#allocation2 + $0x4] sm:$0xf] %vm370, %v340
  %v372 = vld [vmem:[#allocation2 + $0x8] sm:$0x1]
  %v373 = vsel %vm308, %v341, %v372
  %374 = vst [vmem:[#allocation2 + $0x8] sm:$0x1] %v373
  %v375 = vld [vmem:[#allocation2 + $0xc] sm:$0xf]
  %v376 = vsel %vm366, %v348, %v375
  %377 = vst [vmem:[#allocation2 + $0xc] sm:$0xf] %v376
  %378 = vst.msk [vmem:[#allocation2 + $0x10] sm:$0xf] %vm370, %v357
  %v379 = vld [vmem:[#allocation2 + $0x14] sm:$0x1]
  %v380 = vsel %vm308, %v358, %v379
  %381 = vst [vmem:[#allocation2 + $0x14] sm:$0x1] %v380
  %v382 = vld [vmem:[#allocation2] sm:$0xf]
  %v383 = vld [vmem:[#allocation2 + $0x4] sm:$0xf]
  %v384 = vld [vmem:[#allocation2 + $0xc] sm:$0xf]
  %v385 = vld [vmem:[#allocation2 + $0x10] sm:$0xf]
  %v386 = vld [vmem:[%s1] sm:$0xf]
  %v387 = vld [vmem:[%s1 + $0x4] sm:$0xf]
  %v388 = vld [vmem:[%s1 + $0x8] sm:$0xf]
  %v389 = vld [vmem:[%s1 + $0xc] sm:$0xf]
  %v390 = vld [vmem:[%s1 + $0x10] sm:$0xf]
  %v391 = vld [vmem:[%s1 + $0x14] sm:$0xf]
  %v392 = vld [vmem:[%s1 + $0x18] sm:$0xf]
  %v393 = vld [vmem:[%s1 + $0x1c] sm:$0xf]
  %v394 = vld [vmem:[#allocation2 + $0x8] sm:$0x1]
  %v395 = vld [vmem:[#allocation2 + $0x14] sm:$0x1]
  %vm396 = vsmask.f32 3328
  %vm397 = vsmask.f32 7440
  %vm398 = vmor %vm396, %vm397
  %v400 = vshrl.u32 %v382, 16
  %v402 = vrot.slane %v400, 4
  %v403 = vshll.u32 %v382, 16
  %v405 = vrot.slane %v403, 5
  %v406 = vor.u32 %v402, %v405
  %v407 = vrot.slane %v406, 4
  %v409 = vshll.u32 %v383, 16
  %v411 = vrot.slane %v409, 5
  %v412 = vsel %vm398, %v407, %v411
  %v413 = vshrl.u32 %v383, 16
  %v415 = vrot.slane %v413, 4
  %v416 = vor.u32 %v415, %v411
  %v417 = vrot.slane %v416, 4
  %v419 = vshll.u32 %v394, 16
  %v421 = vrot.slane %v419, 5
  %v422 = vsel %vm398, %v417, %v421
  %v424 = vshrl.u32 %v384, 16
  %v426 = vrot.slane %v424, 4
  %v427 = vshll.u32 %v384, 16
  %v429 = vrot.slane %v427, 5
  %v430 = vor.u32 %v426, %v429
  %v431 = vrot.slane %v430, 4
  %v433 = vshll.u32 %v385, 16
  %v435 = vrot.slane %v433, 5
  %v436 = vsel %vm398, %v431, %v435
  %v437 = vshrl.u32 %v385, 16
  %v439 = vrot.slane %v437, 4
  %v440 = vor.u32 %v439, %v435
  %v441 = vrot.slane %v440, 4
  %v443 = vshll.u32 %v395, 16
  %v445 = vrot.slane %v443, 5
  %v446 = vsel %vm398, %v441, %v445
  %s447 = scalar_lea.vmem %s1, 32
  %v448 = vld [vmem:[%s447] sm:$0xf]
  %v449 = vld [vmem:[%s447 + $0x4] sm:$0xf]
  %v450 = vld [vmem:[%s447 + $0x8] sm:$0xf]
  %v451 = vld [vmem:[%s447 + $0xc] sm:$0xf]
  %v452 = vld [vmem:[%s447 + $0x10] sm:$0xf]
  %v453 = vld [vmem:[%s447 + $0x14] sm:$0xf]
  %v454 = vld [vmem:[%s447 + $0x18] sm:$0xf]
  %v455 = vld [vmem:[%s447 + $0x1c] sm:$0xf]
  %v456 = vunpack.c.l.b16 %v412
  %v457 = vunpack.c.l.b16 %v422
  %v458 = vunpack.c.l.b16 %v436
  %v459 = vunpack.c.l.b16 %v446
  %v460 = vpack.c.b16 %v457, %v456
  %v461 = vpack.c.b16 %v459, %v458
  %v470 = vunpack.c.l.b16 %v448
  %v471 = vunpack.c.l.b16 %v449
  %v472 = vunpack.c.l.b16 %v450
  %v473 = vunpack.c.l.b16 %v451
  %v474 = vunpack.c.l.b16 %v452
  %v475 = vunpack.c.l.b16 %v453
  %v476 = vunpack.c.l.b16 %v454
  %v477 = vunpack.c.l.b16 %v455
  %v478 = vpack.c.b16 %v471, %v470
  %v479 = vpack.c.b16 %v473, %v472
  %v480 = vpack.c.b16 %v475, %v474
  %v481 = vpack.c.b16 %v477, %v476
  %vm486 = vcmask 523264
  %v488 = vsel %vm486, %v460, 0
  %v491 = vsel %vm486, %v461, 0
  %493 = vmatpush.bf16.msra.mxu0 0
  %494 = vmatpush.bf16.msra.mxu0 0
  %495 = vmatpush.bf16.msra.mxu0 0
  %496 = vmatpush.bf16.msra.mxu0 0
  %497 = vmatpush.bf16.msra.mxu0 %v481
  %498 = vmatpush.bf16.msra.mxu0 %v480
  %499 = vmatpush.bf16.msra.mxu0 %v479
  %500 = vmatpush.bf16.msra.mxu0 %v478
  %501 = vmatmul.bf16.gmra.mxu0 %v488
  %v502 = vpop.f32.mrf.mxu0
  %v503 = vadd.f32 0.0, %v502
  %v504 = vpop.f32.mrf.mxu0
  %v505 = vadd.f32 0.0, %v504
  %506 = vmatmul.bf16.gmra.mxu0 %v491
  %v507 = vpop.f32.mrf.mxu0
  %v508 = vadd.f32 0.0, %v507
  %v509 = vpop.f32.mrf.mxu0
  %v510 = vadd.f32 0.0, %v509
  %511 = vdwg.mxu0
  %v516 = vunpack.c.l.b16 %v382
  %v517 = vunpack.c.l.b16 %v383
  %v518 = vunpack.c.l.b16 %v384
  %v519 = vunpack.c.l.b16 %v385
  %v520 = vpack.c.b16 %v517, %v516
  %v521 = vpack.c.b16 %v519, %v518
  %v530 = vunpack.c.l.b16 %v386
  %v531 = vunpack.c.l.b16 %v387
  %v532 = vunpack.c.l.b16 %v388
  %v533 = vunpack.c.l.b16 %v389
  %v534 = vunpack.c.l.b16 %v390
  %v535 = vunpack.c.l.b16 %v391
  %v536 = vunpack.c.l.b16 %v392
  %v537 = vunpack.c.l.b16 %v393
  %v538 = vpack.c.b16 %v531, %v530
  %v539 = vpack.c.b16 %v533, %v532
  %v540 = vpack.c.b16 %v535, %v534
  %v541 = vpack.c.b16 %v537, %v536
  %v547 = vsel %vm486, %v520, 0
  %v550 = vsel %vm486, %v521, 0
  %552 = vmatpush.bf16.msra.mxu0 0
  %553 = vmatpush.bf16.msra.mxu0 0
  %554 = vmatpush.bf16.msra.mxu0 0
  %555 = vmatpush.bf16.msra.mxu0 0
  %556 = vmatpush.bf16.msra.mxu0 %v541
  %557 = vmatpush.bf16.msra.mxu0 %v540
  %558 = vmatpush.bf16.msra.mxu0 %v539
  %559 = vmatpush.bf16.msra.mxu0 %v538
  %560 = vmatmul.bf16.gmra.mxu0 %v547
  %v561 = vpop.f32.mrf.mxu0
  %v562 = vadd.f32 %v503, %v561
  %v563 = vpop.f32.mrf.mxu0
  %v564 = vadd.f32 %v505, %v563
  %565 = vmatmul.bf16.gmra.mxu0 %v550
  %v566 = vpop.f32.mrf.mxu0
  %v567 = vadd.f32 %v508, %v566
  %v568 = vpop.f32.mrf.mxu0
  %v569 = vadd.f32 %v510, %v568
  %570 = vdwg.mxu0
  %v571 = vld [vmem:[#allocation2] sm:$0xe]
  %v572 = vld [vmem:[#allocation2 + $0xc] sm:$0xe]
  %vm577 = vcmask 1042432
  %vm578 = vcmask 1046532
  %vm579 = vmor %vm577, %vm578
  %v580 = vrot.slane %v571, 5
  %v581 = vrot.slane %v580, 4
  %v582 = vrot.slane %v383, 5
  %v583 = vsel %vm579, %v581, %v582
  %v584 = vrot.slane %v582, 4
  %v585 = vrot.slane %v394, 5
  %v586 = vsel %vm579, %v584, %v585
  %v587 = vrot.slane %v572, 5
  %v588 = vrot.slane %v587, 4
  %v589 = vrot.slane %v385, 5
  %v590 = vsel %vm579, %v588, %v589
  %v591 = vrot.slane %v589, 4
  %v592 = vrot.slane %v395, 5
  %v593 = vsel %vm579, %v591, %v592
  %s594 = scalar_lea.vmem %s1, 64
  %v595 = vld [vmem:[%s594] sm:$0xf]
  %v596 = vld [vmem:[%s594 + $0x4] sm:$0xf]
  %v597 = vld [vmem:[%s594 + $0x8] sm:$0xf]
  %v598 = vld [vmem:[%s594 + $0xc] sm:$0xf]
  %v599 = vld [vmem:[%s594 + $0x10] sm:$0xf]
  %v600 = vld [vmem:[%s594 + $0x14] sm:$0xf]
  %v601 = vld [vmem:[%s594 + $0x18] sm:$0xf]
  %v602 = vld [vmem:[%s594 + $0x1c] sm:$0xf]
  %v603 = vunpack.c.l.b16 %v583
  %v604 = vunpack.c.l.b16 %v586
  %v605 = vunpack.c.l.b16 %v590
  %v606 = vunpack.c.l.b16 %v593
  %v607 = vpack.c.b16 %v604, %v603
  %v608 = vpack.c.b16 %v606, %v605
  %v617 = vunpack.c.l.b16 %v595
  %v618 = vunpack.c.l.b16 %v596
  %v619 = vunpack.c.l.b16 %v597
  %v620 = vunpack.c.l.b16 %v598
  %v621 = vunpack.c.l.b16 %v599
  %v622 = vunpack.c.l.b16 %v600
  %v623 = vunpack.c.l.b16 %v601
  %v624 = vunpack.c.l.b16 %v602
  %v625 = vpack.c.b16 %v618, %v617
  %v626 = vpack.c.b16 %v620, %v619
  %v627 = vpack.c.b16 %v622, %v621
  %v628 = vpack.c.b16 %v624, %v623
  %v634 = vsel %vm486, %v607, 0
  %v637 = vsel %vm486, %v608, 0
  %639 = vmatpush.bf16.msra.mxu0 0
  %640 = vmatpush.bf16.msra.mxu0 0
  %641 = vmatpush.bf16.msra.mxu0 0
  %642 = vmatpush.bf16.msra.mxu0 0
  %643 = vmatpush.bf16.msra.mxu0 %v628
  %644 = vmatpush.bf16.msra.mxu0 %v627
  %645 = vmatpush.bf16.msra.mxu0 %v626
  %646 = vmatpush.bf16.msra.mxu0 %v625
  %647 = vmatmul.bf16.gmra.mxu0 %v634
  %v648 = vpop.f32.mrf.mxu0
  %v649 = vadd.f32 0.0, %v648
  %v650 = vpop.f32.mrf.mxu0
  %v651 = vadd.f32 0.0, %v650
  %652 = vmatmul.bf16.gmra.mxu0 %v637
  %v653 = vpop.f32.mrf.mxu0
  %v654 = vadd.f32 0.0, %v653
  %v655 = vpop.f32.mrf.mxu0
  %v656 = vadd.f32 0.0, %v655
  %657 = vdwg.mxu0
  %v658 = vadd.f32 %v562, %v649
  %v659 = vadd.f32 %v564, %v651
  %v660 = vadd.f32 %v567, %v654
  %v661 = vadd.f32 %v569, %v656
  %v662 = vld [vmem:[%s4] sm:$0x1]
  %v663 = vld [vmem:[%s5] sm:$0x1]
  %v664 = vadd.f32 %v658, %v659
  %v665 = vadd.f32 %v664, %v660
  %v666 = vadd.f32 %v665, %v661
  %v667 = vrot.slane %v666, 4
  %v668 = vadd.f32 %v666, %v667
  %v669 = vrot.slane %v668, 2
  %v670 = vadd.f32 %v668, %v669
  %v671 = vrot.slane %v670, 1
  %v672 = vadd.f32 %v670, %v671
  %v673 = vmul.f32 %v658, %v658
  %v674 = vmul.f32 %v659, %v659
  %v675 = vmul.f32 %v660, %v660
  %v676 = vmul.f32 %v661, %v661
  %v677 = vadd.f32 %v673, %v674
  %v678 = vadd.f32 %v677, %v675
  %v679 = vadd.f32 %v678, %v676
  %v680 = vrot.slane %v679, 4
  %v681 = vadd.f32 %v679, %v680
  %v682 = vrot.slane %v681, 2
  %v683 = vadd.f32 %v681, %v682
  %v684 = vrot.slane %v683, 1
  %v685 = vadd.f32 %v683, %v684
  %vm686 = vcmask 1040384
  %v687 = vsel %vm686, %v672, %v685
  %688 = vmatpush.msra.mxu0 %v282
  %689 = vmatpush.msra.mxu0 %v281
  %690 = vmatpush.msra.mxu0 %v280
  %691 = vmatpush.msra.mxu0 %v279
  %692 = vmatpush.msra.mxu0 %v278
  %693 = vmatpush.msra.mxu0 %v277
  %694 = vmatpush.msra.mxu0 %v276
  %695 = vmatpush.msra.mxu0 %v275
  %696 = vmatpush.msra.mxu0 %v274
  %697 = vmatpush.msra.mxu0 %v273
  %698 = vmatpush.msra.mxu0 %v272
  %699 = vmatpush.msra.mxu0 %v271
  %700 = vmatpush.msra.mxu0 %v270
  %701 = vmatpush.msra.mxu0 %v269
  %702 = vmatpush.msra.mxu0 %v268
  %703 = vmatpush.msra.mxu0 %v267
  %704 = vmatmul.f32.gmra.mxu0 %v687
  %v705 = vpop.f32.mrf.mxu0
  %v706 = vadd.f32 0.0, %v705
  %707 = vdwg.mxu0
  %v708 = vmul.f32 %v706, 0.001953125
  %v709 = vmul.f32 %v708, %v708
  %v711 = vrot.slane %v709, 7
  %v713 = vsub.f32 %v708, %v711
  %v714 = vadd.f32 %v713, 1e-05
  %v715 = vrsqrt.pop %v714
  %v716 = vmul.f32 %v715, %v714
  %v717 = vmul.f32 %v716, %v715
  %v718 = vmul.f32 0.5, %v717
  %v719 = vsub.f32 1.5, %v718
  %v720 = vmul.f32 %v715, %v719
  %vm721 = vweird.f32 %v714
  %vm722 = vweird.f32 %v715
  %vm723 = vmor %vm721, %vm722
  %v724 = vsel %vm723, %v715, %v720
  %v726 = vrot.slane %v724, 1
  %v728 = vmul.f32 %v662, %v726
  %v729 = vmul.f32 %v708, %v728
  %v730 = vsub.f32 %v663, %v729
  %v732 = vrot.slane %v730, 7
  %v734 = vsel %vm686, %v728, %v732
  %vm735 = vcmask 64512
  %v737 = vsel %vm735, %v734, 0
  %739 = vmatpush.msra.mxu0 0.0
  %740 = vmatpush.msra.mxu0 0.0
  %741 = vmatpush.msra.mxu0 0.0
  %742 = vmatpush.msra.mxu0 0.0
  %743 = vmatpush.msra.mxu0 0.0
  %744 = vmatpush.msra.mxu0 0.0
  %745 = vmatpush.msra.mxu0 0.0
  %746 = vmatpush.msra.mxu0 0.0
  %747 = vmatpush.msra.mxu0 0.0
  %748 = vmatpush.msra.mxu0 0.0
  %749 = vmatpush.msra.mxu0 0.0
  %750 = vmatpush.msra.mxu0 0.0
  %751 = vmatpush.msra.mxu0 0.0
  %752 = vmatpush.msra.mxu0 0.0
  %753 = vmatpush.msra.mxu0 0.0
  %754 = vmatpush.msra.mxu0 %v297
  %755 = vmatmul.f32.gmra.mxu0 %v737
  %v756 = vpop.f32.mrf.mxu0
  %v757 = vadd.f32 0.0, %v756
  %758 = vdwg.mxu0
  %v759 = vperm.slane %v757, 0
  %v760 = vmul.f32 %v658, %v759
  %v761 = vmul.f32 %v659, %v759
  %v762 = vmul.f32 %v660, %v759
  %v763 = vmul.f32 %v661, %v759
  %v764 = vperm.slane %v757, 1
  %v765 = vadd.f32 %v760, %v764
  %v766 = vadd.f32 %v761, %v764
  %v767 = vadd.f32 %v762, %v764
  %v768 = vadd.f32 %v763, %v764
  %v769 = vmax.f32 %v765, 0.0
  %v770 = vmax.f32 %v766, 0.0
  %v771 = vmax.f32 %v767, 0.0
  %v772 = vmax.f32 %v768, 0.0
  %v773 = vpack.c.bf16 %v769, %v769
  %v774 = vpack.c.bf16 %v770, %v770
  %v775 = vpack.c.bf16 %v771, %v771
  %v776 = vpack.c.bf16 %v772, %v772
  %vm777 = vcmask 1040384
  %vm778 = vmand %vm777, %vm307
  %v779 = vld [vmem:[#allocation3] sm:$0x1]
  %v780 = vsel %vm778, 0, %v779
  %781 = vst [vmem:[#allocation3] sm:$0x1] %v780
  %v782 = vld [vmem:[#allocation3 + $0xc] sm:$0x1]
  %v783 = vsel %vm778, 0, %v782
  %784 = vst [vmem:[#allocation3 + $0xc] sm:$0x1] %v783
  %vm785 = vmand %vm777, %vm315
  %v786 = vld [vmem:[#allocation3 + $0x8] sm:$0x1]
  %v787 = vsel %vm785, 0, %v786
  %788 = vst [vmem:[#allocation3 + $0x8] sm:$0x1] %v787
  %v789 = vld [vmem:[#allocation3 + $0x14] sm:$0x1]
  %v790 = vsel %vm785, 0, %v789
  %791 = vst [vmem:[#allocation3 + $0x14] sm:$0x1] %v790
  %v793 = vshrl.u32 %v773, 16
  %v795 = vrot.slane %v793, 7
  %v796 = vshll.u32 %v773, 16
  %v798 = vor.u32 %v795, %v796
  %v799 = vrot.slane %v795, 4
  %v801 = vshrl.u32 %v774, 16
  %v803 = vrot.slane %v801, 7
  %v804 = vshll.u32 %v774, 16
  %v806 = vor.u32 %v803, %v804
  %v807 = vsel %vm324, %v799, %v806
  %v808 = vrot.slane %v803, 4
  %v810 = vshrl.u32 %v775, 16
  %v812 = vrot.slane %v810, 7
  %v813 = vshll.u32 %v775, 16
  %v815 = vor.u32 %v812, %v813
  %v816 = vrot.slane %v812, 4
  %v818 = vshrl.u32 %v776, 16
  %v820 = vrot.slane %v818, 7
  %v821 = vshll.u32 %v776, 16
  %v823 = vor.u32 %v820, %v821
  %v824 = vsel %vm324, %v816, %v823
  %v825 = vrot.slane %v820, 4
  %vm832 = vcmask 1043456
  %vm833 = vmand %vm832, %vm315
  %v834 = vld [vmem:[#allocation3] sm:$0xf]
  %v835 = vsel %vm833, %v798, %v834
  %836 = vst [vmem:[#allocation3] sm:$0xf] %v835
  %837 = vst [vmem:[#allocation3 + $0x4] sm:$0xf] %v807
  %v838 = vld [vmem:[#allocation3 + $0x8] sm:$0x1]
  %v839 = vsel %vm778, %v808, %v838
  %840 = vst [vmem:[#allocation3 + $0x8] sm:$0x1] %v839
  %v841 = vld [vmem:[#allocation3 + $0xc] sm:$0xf]
  %v842 = vsel %vm833, %v815, %v841
  %843 = vst [vmem:[#allocation3 + $0xc] sm:$0xf] %v842
  %844 = vst [vmem:[#allocation3 + $0x10] sm:$0xf] %v824
  %v845 = vld [vmem:[#allocation3 + $0x14] sm:$0x1]
  %v846 = vsel %vm778, %v825, %v845
  %847 = vst [vmem:[#allocation3 + $0x14] sm:$0x1] %v846
  %v848 = vld [vmem:[#allocation3] sm:$0xf]
  %v849 = vld [vmem:[#allocation3 + $0x4] sm:$0xf]
  %v850 = vld [vmem:[#allocation3 + $0xc] sm:$0xf]
  %v851 = vld [vmem:[#allocation3 + $0x10] sm:$0xf]
  %v852 = vld [vmem:[%s2] sm:$0xf]
  %v853 = vld [vmem:[%s2 + $0x4] sm:$0xf]
  %v854 = vld [vmem:[%s2 + $0x8] sm:$0xf]
  %v855 = vld [vmem:[%s2 + $0xc] sm:$0xf]
  %v856 = vld [vmem:[%s2 + $0x10] sm:$0xf]
  %v857 = vld [vmem:[%s2 + $0x14] sm:$0xf]
  %v858 = vld [vmem:[%s2 + $0x18] sm:$0xf]
  %v859 = vld [vmem:[%s2 + $0x1c] sm:$0xf]
  %v860 = vld [vmem:[%s2 + $0x20] sm:$0xf]
  %v861 = vld [vmem:[%s2 + $0x24] sm:$0xf]
  %v862 = vld [vmem:[%s2 + $0x28] sm:$0xf]
  %v863 = vld [vmem:[%s2 + $0x2c] sm:$0xf]
  %v864 = vld [vmem:[%s2 + $0x30] sm:$0xf]
  %v865 = vld [vmem:[%s2 + $0x34] sm:$0xf]
  %v866 = vld [vmem:[%s2 + $0x38] sm:$0xf]
  %v867 = vld [vmem:[%s2 + $0x3c] sm:$0xf]
  %v868 = vld [vmem:[#allocation3 + $0x8] sm:$0x1]
  %v869 = vld [vmem:[#allocation3 + $0x14] sm:$0x1]
  %v871 = vshrl.u32 %v848, 16
  %v873 = vrot.slane %v871, 4
  %v874 = vshll.u32 %v848, 16
  %v876 = vrot.slane %v874, 5
  %v877 = vor.u32 %v873, %v876
  %v878 = vrot.slane %v877, 4
  %v880 = vshll.u32 %v849, 16
  %v882 = vrot.slane %v880, 5
  %v883 = vsel %vm398, %v878, %v882
  %v884 = vshrl.u32 %v849, 16
  %v886 = vrot.slane %v884, 4
  %v887 = vor.u32 %v886, %v882
  %v888 = vrot.slane %v887, 4
  %v890 = vshll.u32 %v868, 16
  %v892 = vrot.slane %v890, 5
  %v893 = vsel %vm398, %v888, %v892
  %v895 = vshrl.u32 %v850, 16
  %v897 = vrot.slane %v895, 4
  %v898 = vshll.u32 %v850, 16
  %v900 = vrot.slane %v898, 5
  %v901 = vor.u32 %v897, %v900
  %v902 = vrot.slane %v901, 4
  %v904 = vshll.u32 %v851, 16
  %v906 = vrot.slane %v904, 5
  %v907 = vsel %vm398, %v902, %v906
  %v908 = vshrl.u32 %v851, 16
  %v910 = vrot.slane %v908, 4
  %v911 = vor.u32 %v910, %v906
  %v912 = vrot.slane %v911, 4
  %v914 = vshll.u32 %v869, 16
  %v916 = vrot.slane %v914, 5
  %v917 = vsel %vm398, %v912, %v916
  %s918 = scalar_lea.vmem %s2, 64
  %v919 = vld [vmem:[%s918] sm:$0xf]
  %v920 = vld [vmem:[%s918 + $0x4] sm:$0xf]
  %v921 = vld [vmem:[%s918 + $0x8] sm:$0xf]
  %v922 = vld [vmem:[%s918 + $0xc] sm:$0xf]
  %v923 = vld [vmem:[%s918 + $0x10] sm:$0xf]
  %v924 = vld [vmem:[%s918 + $0x14] sm:$0xf]
  %v925 = vld [vmem:[%s918 + $0x18] sm:$0xf]
  %v926 = vld [vmem:[%s918 + $0x1c] sm:$0xf]
  %v927 = vld [vmem:[%s918 + $0x20] sm:$0xf]
  %v928 = vld [vmem:[%s918 + $0x24] sm:$0xf]
  %v929 = vld [vmem:[%s918 + $0x28] sm:$0xf]
  %v930 = vld [vmem:[%s918 + $0x2c] sm:$0xf]
  %v931 = vld [vmem:[%s918 + $0x30] sm:$0xf]
  %v932 = vld [vmem:[%s918 + $0x34] sm:$0xf]
  %v933 = vld [vmem:[%s918 + $0x38] sm:$0xf]
  %v934 = vld [vmem:[%s918 + $0x3c] sm:$0xf]
  %v935 = vunpack.c.l.b16 %v883
  %v936 = vunpack.c.l.b16 %v893
  %v937 = vunpack.c.l.b16 %v907
  %v938 = vunpack.c.l.b16 %v917
  %v939 = vpack.c.b16 %v936, %v935
  %v940 = vpack.c.b16 %v938, %v937
  %v959 = vunpack.c.l.b16 %v919
  %v960 = vunpack.c.l.b16 %v920
  %v961 = vunpack.c.l.b16 %v921
  %v962 = vunpack.c.l.b16 %v922
  %v963 = vunpack.c.l.b16 %v923
  %v964 = vunpack.c.l.b16 %v924
  %v965 = vunpack.c.l.b16 %v925
  %v966 = vunpack.c.l.b16 %v926
  %v967 = vunpack.c.l.b16 %v927
  %v968 = vunpack.c.l.b16 %v928
  %v969 = vunpack.c.l.b16 %v929
  %v970 = vunpack.c.l.b16 %v930
  %v971 = vunpack.c.l.b16 %v931
  %v972 = vunpack.c.l.b16 %v932
  %v973 = vunpack.c.l.b16 %v933
  %v974 = vunpack.c.l.b16 %v934
  %v975 = vpack.c.b16 %v960, %v959
  %v976 = vpack.c.b16 %v962, %v961
  %v977 = vpack.c.b16 %v964, %v963
  %v978 = vpack.c.b16 %v966, %v965
  %v979 = vpack.c.b16 %v968, %v967
  %v980 = vpack.c.b16 %v970, %v969
  %v981 = vpack.c.b16 %v972, %v971
  %v982 = vpack.c.b16 %v974, %v973
  %991 = vmatpush.bf16.msra.mxu0 %v982
  %992 = vmatpush.bf16.msra.mxu0 %v981
  %993 = vmatpush.bf16.msra.mxu0 %v980
  %994 = vmatpush.bf16.msra.mxu0 %v979
  %995 = vmatpush.bf16.msra.mxu0 %v978
  %996 = vmatpush.bf16.msra.mxu0 %v977
  %997 = vmatpush.bf16.msra.mxu0 %v976
  %998 = vmatpush.bf16.msra.mxu0 %v975
  %999 = vmatmul.bf16.gmra.mxu0 %v939
  %v1000 = vpop.f32.mrf.mxu0
  %v1001 = vadd.f32 0.0, %v1000
  %v1002 = vpop.f32.mrf.mxu0
  %v1003 = vadd.f32 0.0, %v1002
  %1004 = vmatmul.bf16.gmra.mxu0 %v940
  %v1005 = vpop.f32.mrf.mxu0
  %v1006 = vadd.f32 0.0, %v1005
  %v1007 = vpop.f32.mrf.mxu0
  %v1008 = vadd.f32 0.0, %v1007
  %1009 = vdwg.mxu0
  %v1014 = vunpack.c.l.b16 %v848
  %v1015 = vunpack.c.l.b16 %v849
  %v1016 = vunpack.c.l.b16 %v850
  %v1017 = vunpack.c.l.b16 %v851
  %v1018 = vpack.c.b16 %v1015, %v1014
  %v1019 = vpack.c.b16 %v1017, %v1016
  %v1038 = vunpack.c.l.b16 %v852
  %v1039 = vunpack.c.l.b16 %v853
  %v1040 = vunpack.c.l.b16 %v854
  %v1041 = vunpack.c.l.b16 %v855
  %v1042 = vunpack.c.l.b16 %v856
  %v1043 = vunpack.c.l.b16 %v857
  %v1044 = vunpack.c.l.b16 %v858
  %v1045 = vunpack.c.l.b16 %v859
  %v1046 = vunpack.c.l.b16 %v860
  %v1047 = vunpack.c.l.b16 %v861
  %v1048 = vunpack.c.l.b16 %v862
  %v1049 = vunpack.c.l.b16 %v863
  %v1050 = vunpack.c.l.b16 %v864
  %v1051 = vunpack.c.l.b16 %v865
  %v1052 = vunpack.c.l.b16 %v866
  %v1053 = vunpack.c.l.b16 %v867
  %v1054 = vpack.c.b16 %v1039, %v1038
  %v1055 = vpack.c.b16 %v1041, %v1040
  %v1056 = vpack.c.b16 %v1043, %v1042
  %v1057 = vpack.c.b16 %v1045, %v1044
  %v1058 = vpack.c.b16 %v1047, %v1046
  %v1059 = vpack.c.b16 %v1049, %v1048
  %v1060 = vpack.c.b16 %v1051, %v1050
  %v1061 = vpack.c.b16 %v1053, %v1052
  %1070 = vmatpush.bf16.msra.mxu0 %v1061
  %1071 = vmatpush.bf16.msra.mxu0 %v1060
  %1072 = vmatpush.bf16.msra.mxu0 %v1059
  %1073 = vmatpush.bf16.msra.mxu0 %v1058
  %1074 = vmatpush.bf16.msra.mxu0 %v1057
  %1075 = vmatpush.bf16.msra.mxu0 %v1056
  %1076 = vmatpush.bf16.msra.mxu0 %v1055
  %1077 = vmatpush.bf16.msra.mxu0 %v1054
  %1078 = vmatmul.bf16.gmra.mxu0 %v1018
  %v1079 = vpop.f32.mrf.mxu0
  %v1080 = vadd.f32 %v1001, %v1079
  %v1081 = vpop.f32.mrf.mxu0
  %v1082 = vadd.f32 %v1003, %v1081
  %1083 = vmatmul.bf16.gmra.mxu0 %v1019
  %v1084 = vpop.f32.mrf.mxu0
  %v1085 = vadd.f32 %v1006, %v1084
  %v1086 = vpop.f32.mrf.mxu0
  %v1087 = vadd.f32 %v1008, %v1086
  %1088 = vdwg.mxu0
  %v1089 = vld [vmem:[#allocation3] sm:$0xe]
  %v1090 = vld [vmem:[#allocation3 + $0xc] sm:$0xe]
  %v1095 = vrot.slane %v1089, 5
  %v1096 = vrot.slane %v1095, 4
  %v1097 = vrot.slane %v849, 5
  %v1098 = vsel %vm579, %v1096, %v1097
  %v1099 = vrot.slane %v1097, 4
  %v1100 = vrot.slane %v868, 5
  %v1101 = vsel %vm579, %v1099, %v1100
  %v1102 = vrot.slane %v1090, 5
  %v1103 = vrot.slane %v1102, 4
  %v1104 = vrot.slane %v851, 5
  %v1105 = vsel %vm579, %v1103, %v1104
  %v1106 = vrot.slane %v1104, 4
  %v1107 = vrot.slane %v869, 5
  %v1108 = vsel %vm579, %v1106, %v1107
  %s1109 = scalar_lea.vmem %s2, 128
  %v1110 = vld [vmem:[%s1109] sm:$0xf]
  %v1111 = vld [vmem:[%s1109 + $0x4] sm:$0xf]
  %v1112 = vld [vmem:[%s1109 + $0x8] sm:$0xf]
  %v1113 = vld [vmem:[%s1109 + $0xc] sm:$0xf]
  %v1114 = vld [vmem:[%s1109 + $0x10] sm:$0xf]
  %v1115 = vld [vmem:[%s1109 + $0x14] sm:$0xf]
  %v1116 = vld [vmem:[%s1109 + $0x18] sm:$0xf]
  %v1117 = vld [vmem:[%s1109 + $0x1c] sm:$0xf]
  %v1118 = vld [vmem:[%s1109 + $0x20] sm:$0xf]
  %v1119 = vld [vmem:[%s1109 + $0x24] sm:$0xf]
  %v1120 = vld [vmem:[%s1109 + $0x28] sm:$0xf]
  %v1121 = vld [vmem:[%s1109 + $0x2c] sm:$0xf]
  %v1122 = vld [vmem:[%s1109 + $0x30] sm:$0xf]
  %v1123 = vld [vmem:[%s1109 + $0x34] sm:$0xf]
  %v1124 = vld [vmem:[%s1109 + $0x38] sm:$0xf]
  %v1125 = vld [vmem:[%s1109 + $0x3c] sm:$0xf]
  %v1126 = vunpack.c.l.b16 %v1098
  %v1127 = vunpack.c.l.b16 %v1101
  %v1128 = vunpack.c.l.b16 %v1105
  %v1129 = vunpack.c.l.b16 %v1108
  %v1130 = vpack.c.b16 %v1127, %v1126
  %v1131 = vpack.c.b16 %v1129, %v1128
  %v1150 = vunpack.c.l.b16 %v1110
  %v1151 = vunpack.c.l.b16 %v1111
  %v1152 = vunpack.c.l.b16 %v1112
  %v1153 = vunpack.c.l.b16 %v1113
  %v1154 = vunpack.c.l.b16 %v1114
  %v1155 = vunpack.c.l.b16 %v1115
  %v1156 = vunpack.c.l.b16 %v1116
  %v1157 = vunpack.c.l.b16 %v1117
  %v1158 = vunpack.c.l.b16 %v1118
  %v1159 = vunpack.c.l.b16 %v1119
  %v1160 = vunpack.c.l.b16 %v1120
  %v1161 = vunpack.c.l.b16 %v1121
  %v1162 = vunpack.c.l.b16 %v1122
  %v1163 = vunpack.c.l.b16 %v1123
  %v1164 = vunpack.c.l.b16 %v1124
  %v1165 = vunpack.c.l.b16 %v1125
  %v1166 = vpack.c.b16 %v1151, %v1150
  %v1167 = vpack.c.b16 %v1153, %v1152
  %v1168 = vpack.c.b16 %v1155, %v1154
  %v1169 = vpack.c.b16 %v1157, %v1156
  %v1170 = vpack.c.b16 %v1159, %v1158
  %v1171 = vpack.c.b16 %v1161, %v1160
  %v1172 = vpack.c.b16 %v1163, %v1162
  %v1173 = vpack.c.b16 %v1165, %v1164
  %1182 = vmatpush.bf16.msra.mxu0 %v1173
  %1183 = vmatpush.bf16.msra.mxu0 %v1172
  %1184 = vmatpush.bf16.msra.mxu0 %v1171
  %1185 = vmatpush.bf16.msra.mxu0 %v1170
  %1186 = vmatpush.bf16.msra.mxu0 %v1169
  %1187 = vmatpush.bf16.msra.mxu0 %v1168
  %1188 = vmatpush.bf16.msra.mxu0 %v1167
  %1189 = vmatpush.bf16.msra.mxu0 %v1166
  %1190 = vmatmul.bf16.gmra.mxu0 %v1130
  %v1191 = vpop.f32.mrf.mxu0
  %v1192 = vadd.f32 0.0, %v1191
  %v1193 = vpop.f32.mrf.mxu0
  %v1194 = vadd.f32 0.0, %v1193
  %1195 = vmatmul.bf16.gmra.mxu0 %v1131
  %v1196 = vpop.f32.mrf.mxu0
  %v1197 = vadd.f32 0.0, %v1196
  %v1198 = vpop.f32.mrf.mxu0
  %v1199 = vadd.f32 0.0, %v1198
  %1200 = vdwg.mxu0
  %v1201 = vadd.f32 %v1080, %v1192
  %v1202 = vadd.f32 %v1082, %v1194
  %v1203 = vadd.f32 %v1085, %v1197
  %v1204 = vadd.f32 %v1087, %v1199
  %v1205 = vld [vmem:[%s4 + $0x1] sm:$0x1]
  %v1206 = vld [vmem:[%s5 + $0x1] sm:$0x1]
  %v1207 = vadd.f32 %v1201, %v1202
  %v1208 = vadd.f32 %v1207, %v1203
  %v1209 = vadd.f32 %v1208, %v1204
  %v1210 = vrot.slane %v1209, 4
  %v1211 = vadd.f32 %v1209, %v1210
  %v1212 = vrot.slane %v1211, 2
  %v1213 = vadd.f32 %v1211, %v1212
  %v1214 = vrot.slane %v1213, 1
  %v1215 = vadd.f32 %v1213, %v1214
  %v1216 = vmul.f32 %v1201, %v1201
  %v1217 = vmul.f32 %v1202, %v1202
  %v1218 = vmul.f32 %v1203, %v1203
  %v1219 = vmul.f32 %v1204, %v1204
  %v1220 = vadd.f32 %v1216, %v1217
  %v1221 = vadd.f32 %v1220, %v1218
  %v1222 = vadd.f32 %v1221, %v1219
  %v1223 = vrot.slane %v1222, 4
  %v1224 = vadd.f32 %v1222, %v1223
  %v1225 = vrot.slane %v1224, 2
  %v1226 = vadd.f32 %v1224, %v1225
  %v1227 = vrot.slane %v1226, 1
  %v1228 = vadd.f32 %v1226, %v1227
  %v1229 = vsel %vm686, %v1215, %v1228
  %1230 = vmatpush.msra.mxu0 %v282
  %1231 = vmatpush.msra.mxu0 %v281
  %1232 = vmatpush.msra.mxu0 %v280
  %1233 = vmatpush.msra.mxu0 %v279
  %1234 = vmatpush.msra.mxu0 %v278
  %1235 = vmatpush.msra.mxu0 %v277
  %1236 = vmatpush.msra.mxu0 %v276
  %1237 = vmatpush.msra.mxu0 %v275
  %1238 = vmatpush.msra.mxu0 %v274
  %1239 = vmatpush.msra.mxu0 %v273
  %1240 = vmatpush.msra.mxu0 %v272
  %1241 = vmatpush.msra.mxu0 %v271
  %1242 = vmatpush.msra.mxu0 %v270
  %1243 = vmatpush.msra.mxu0 %v269
  %1244 = vmatpush.msra.mxu0 %v268
  %1245 = vmatpush.msra.mxu0 %v267
  %1246 = vmatmul.f32.gmra.mxu0 %v1229
  %v1247 = vpop.f32.mrf.mxu0
  %v1248 = vadd.f32 0.0, %v1247
  %1249 = vdwg.mxu0
  %v1250 = vmul.f32 %v1248, 0.001953125
  %v1251 = vmul.f32 %v1250, %v1250
  %v1253 = vrot.slane %v1251, 7
  %v1255 = vsub.f32 %v1250, %v1253
  %v1256 = vadd.f32 %v1255, 1e-05
  %v1257 = vrsqrt.pop %v1256
  %v1258 = vmul.f32 %v1257, %v1256
  %v1259 = vmul.f32 %v1258, %v1257
  %v1260 = vmul.f32 0.5, %v1259
  %v1261 = vsub.f32 1.5, %v1260
  %v1262 = vmul.f32 %v1257, %v1261
  %vm1263 = vweird.f32 %v1256
  %vm1264 = vweird.f32 %v1257
  %vm1265 = vmor %vm1263, %vm1264
  %v1266 = vsel %vm1265, %v1257, %v1262
  %v1268 = vrot.slane %v1266, 1
  %v1270 = vmul.f32 %v1205, %v1268
  %v1271 = vmul.f32 %v1250, %v1270
  %v1272 = vsub.f32 %v1206, %v1271
  %v1274 = vrot.slane %v1272, 7
  %v1276 = vsel %vm686, %v1270, %v1274
  %v1278 = vsel %vm735, %v1276, 0
  %1280 = vmatpush.msra.mxu0 0.0
  %1281 = vmatpush.msra.mxu0 0.0
  %1282 = vmatpush.msra.mxu0 0.0
  %1283 = vmatpush.msra.mxu0 0.0
  %1284 = vmatpush.msra.mxu0 0.0
  %1285 = vmatpush.msra.mxu0 0.0
  %1286 = vmatpush.msra.mxu0 0.0
  %1287 = vmatpush.msra.mxu0 0.0
  %1288 = vmatpush.msra.mxu0 0.0
  %1289 = vmatpush.msra.mxu0 0.0
  %1290 = vmatpush.msra.mxu0 0.0
  %1291 = vmatpush.msra.mxu0 0.0
  %1292 = vmatpush.msra.mxu0 0.0
  %1293 = vmatpush.msra.mxu0 0.0
  %1294 = vmatpush.msra.mxu0 0.0
  %1295 = vmatpush.msra.mxu0 %v297
  %1296 = vmatmul.f32.gmra.mxu0 %v1278
  %v1297 = vpop.f32.mrf.mxu0
  %v1298 = vadd.f32 0.0, %v1297
  %1299 = vdwg.mxu0
  %v1300 = vperm.slane %v1298, 0
  %v1301 = vmul.f32 %v1201, %v1300
  %v1302 = vmul.f32 %v1202, %v1300
  %v1303 = vmul.f32 %v1203, %v1300
  %v1304 = vmul.f32 %v1204, %v1300
  %v1305 = vperm.slane %v1298, 1
  %v1306 = vadd.f32 %v1301, %v1305
  %v1307 = vadd.f32 %v1302, %v1305
  %v1308 = vadd.f32 %v1303, %v1305
  %v1309 = vadd.f32 %v1304, %v1305
  %v1310 = vld [vmem:[#allocation2] sm:$0xf]
  %v1311 = vld [vmem:[#allocation2 + $0x4] sm:$0xf]
  %v1312 = vld [vmem:[#allocation2 + $0x8] sm:$0x1]
  %v1313 = vld [vmem:[#allocation2 + $0xc] sm:$0xf]
  %v1314 = vld [vmem:[#allocation2 + $0x10] sm:$0xf]
  %v1315 = vld [vmem:[#allocation2 + $0x14] sm:$0x1]
  %v1317 = vshrl.u32 %v1310, 16
  %v1319 = vrot.slane %v1317, 4
  %v1320 = vshll.u32 %v1310, 16
  %v1322 = vrot.slane %v1320, 5
  %v1323 = vor.u32 %v1319, %v1322
  %v1324 = vrot.slane %v1323, 4
  %v1326 = vshll.u32 %v1311, 16
  %v1328 = vrot.slane %v1326, 5
  %v1329 = vsel %vm398, %v1324, %v1328
  %v1330 = vshrl.u32 %v1311, 16
  %v1332 = vrot.slane %v1330, 4
  %v1333 = vor.u32 %v1332, %v1328
  %v1334 = vrot.slane %v1333, 4
  %v1336 = vshll.u32 %v1312, 16
  %v1338 = vrot.slane %v1336, 5
  %v1339 = vsel %vm398, %v1334, %v1338
  %v1341 = vshrl.u32 %v1313, 16
  %v1343 = vrot.slane %v1341, 4
  %v1344 = vshll.u32 %v1313, 16
  %v1346 = vrot.slane %v1344, 5
  %v1347 = vor.u32 %v1343, %v1346
  %v1348 = vrot.slane %v1347, 4
  %v1350 = vshll.u32 %v1314, 16
  %v1352 = vrot.slane %v1350, 5
  %v1353 = vsel %vm398, %v1348, %v1352
  %v1354 = vshrl.u32 %v1314, 16
  %v1356 = vrot.slane %v1354, 4
  %v1357 = vor.u32 %v1356, %v1352
  %v1358 = vrot.slane %v1357, 4
  %v1360 = vshll.u32 %v1315, 16
  %v1362 = vrot.slane %v1360, 5
  %v1363 = vsel %vm398, %v1358, %v1362
  %v1364 = vld [vmem:[%s3] sm:$0xf]
  %v1365 = vld [vmem:[%s3 + $0x4] sm:$0xf]
  %v1366 = vld [vmem:[%s3 + $0x8] sm:$0xf]
  %v1367 = vld [vmem:[%s3 + $0xc] sm:$0xf]
  %v1368 = vld [vmem:[%s3 + $0x10] sm:$0xf]
  %v1369 = vld [vmem:[%s3 + $0x14] sm:$0xf]
  %v1370 = vld [vmem:[%s3 + $0x18] sm:$0xf]
  %v1371 = vld [vmem:[%s3 + $0x1c] sm:$0xf]
  %v1372 = vunpack.c.l.b16 %v1329
  %v1373 = vunpack.c.l.b16 %v1339
  %v1374 = vunpack.c.l.b16 %v1353
  %v1375 = vunpack.c.l.b16 %v1363
  %v1376 = vpack.c.b16 %v1373, %v1372
  %v1377 = vpack.c.b16 %v1375, %v1374
  %v1386 = vunpack.c.l.b16 %v1364
  %v1387 = vunpack.c.l.b16 %v1365
  %v1388 = vunpack.c.l.b16 %v1366
  %v1389 = vunpack.c.l.b16 %v1367
  %v1390 = vunpack.c.l.b16 %v1368
  %v1391 = vunpack.c.l.b16 %v1369
  %v1392 = vunpack.c.l.b16 %v1370
  %v1393 = vunpack.c.l.b16 %v1371
  %v1394 = vpack.c.b16 %v1387, %v1386
  %v1395 = vpack.c.b16 %v1389, %v1388
  %v1396 = vpack.c.b16 %v1391, %v1390
  %v1397 = vpack.c.b16 %v1393, %v1392
  %v1403 = vsel %vm486, %v1376, 0
  %v1406 = vsel %vm486, %v1377, 0
  %1408 = vmatpush.bf16.msra.mxu0 0
  %1409 = vmatpush.bf16.msra.mxu0 0
  %1410 = vmatpush.bf16.msra.mxu0 0
  %1411 = vmatpush.bf16.msra.mxu0 0
  %1412 = vmatpush.bf16.msra.mxu0 %v1397
  %1413 = vmatpush.bf16.msra.mxu0 %v1396
  %1414 = vmatpush.bf16.msra.mxu0 %v1395
  %1415 = vmatpush.bf16.msra.mxu0 %v1394
  %1416 = vmatmul.bf16.gmra.mxu0 %v1403
  %v1417 = vpop.f32.mrf.mxu0
  %v1418 = vadd.f32 0.0, %v1417
  %v1419 = vpop.f32.mrf.mxu0
  %v1420 = vadd.f32 0.0, %v1419
  %1421 = vmatmul.bf16.gmra.mxu0 %v1406
  %v1422 = vpop.f32.mrf.mxu0
  %v1423 = vadd.f32 0.0, %v1422
  %v1424 = vpop.f32.mrf.mxu0
  %v1425 = vadd.f32 0.0, %v1424
  %1426 = vdwg.mxu0
  %v1427 = vld [vmem:[%s4 + $0x2] sm:$0x1]
  %v1428 = vld [vmem:[%s5 + $0x2] sm:$0x1]
  %v1429 = vadd.f32 %v1418, %v1420
  %v1430 = vadd.f32 %v1429, %v1423
  %v1431 = vadd.f32 %v1430, %v1425
  %v1432 = vrot.slane %v1431, 4
  %v1433 = vadd.f32 %v1431, %v1432
  %v1434 = vrot.slane %v1433, 2
  %v1435 = vadd.f32 %v1433, %v1434
  %v1436 = vrot.slane %v1435, 1
  %v1437 = vadd.f32 %v1435, %v1436
  %v1438 = vmul.f32 %v1418, %v1418
  %v1439 = vmul.f32 %v1420, %v1420
  %v1440 = vmul.f32 %v1423, %v1423
  %v1441 = vmul.f32 %v1425, %v1425
  %v1442 = vadd.f32 %v1438, %v1439
  %v1443 = vadd.f32 %v1442, %v1440
  %v1444 = vadd.f32 %v1443, %v1441
  %v1445 = vrot.slane %v1444, 4
  %v1446 = vadd.f32 %v1444, %v1445
  %v1447 = vrot.slane %v1446, 2
  %v1448 = vadd.f32 %v1446, %v1447
  %v1449 = vrot.slane %v1448, 1
  %v1450 = vadd.f32 %v1448, %v1449
  %v1451 = vsel %vm686, %v1437, %v1450
  %1452 = vmatpush.msra.mxu0 %v282
  %1453 = vmatpush.msra.mxu0 %v281
  %1454 = vmatpush.msra.mxu0 %v280
  %1455 = vmatpush.msra.mxu0 %v279
  %1456 = vmatpush.msra.mxu0 %v278
  %1457 = vmatpush.msra.mxu0 %v277
  %1458 = vmatpush.msra.mxu0 %v276
  %1459 = vmatpush.msra.mxu0 %v275
  %1460 = vmatpush.msra.mxu0 %v274
  %1461 = vmatpush.msra.mxu0 %v273
  %1462 = vmatpush.msra.mxu0 %v272
  %1463 = vmatpush.msra.mxu0 %v271
  %1464 = vmatpush.msra.mxu0 %v270
  %1465 = vmatpush.msra.mxu0 %v269
  %1466 = vmatpush.msra.mxu0 %v268
  %1467 = vmatpush.msra.mxu0 %v267
  %1468 = vmatmul.f32.gmra.mxu0 %v1451
  %v1469 = vpop.f32.mrf.mxu0
  %v1470 = vadd.f32 0.0, %v1469
  %1471 = vdwg.mxu0
  %v1472 = vmul.f32 %v1470, 0.001953125
  %v1473 = vmul.f32 %v1472, %v1472
  %v1475 = vrot.slane %v1473, 7
  %v1477 = vsub.f32 %v1472, %v1475
  %v1478 = vadd.f32 %v1477, 1e-05
  %v1479 = vrsqrt.pop %v1478
  %v1480 = vmul.f32 %v1479, %v1478
  %v1481 = vmul.f32 %v1480, %v1479
  %v1482 = vmul.f32 0.5, %v1481
  %v1483 = vsub.f32 1.5, %v1482
  %v1484 = vmul.f32 %v1479, %v1483
  %vm1485 = vweird.f32 %v1478
  %vm1486 = vweird.f32 %v1479
  %vm1487 = vmor %vm1485, %vm1486
  %v1488 = vsel %vm1487, %v1479, %v1484
  %v1490 = vrot.slane %v1488, 1
  %v1492 = vmul.f32 %v1427, %v1490
  %v1493 = vmul.f32 %v1472, %v1492
  %v1494 = vsub.f32 %v1428, %v1493
  %v1496 = vrot.slane %v1494, 7
  %v1498 = vsel %vm686, %v1492, %v1496
  %v1500 = vsel %vm735, %v1498, 0
  %1502 = vmatpush.msra.mxu0 0.0
  %1503 = vmatpush.msra.mxu0 0.0
  %1504 = vmatpush.msra.mxu0 0.0
  %1505 = vmatpush.msra.mxu0 0.0
  %1506 = vmatpush.msra.mxu0 0.0
  %1507 = vmatpush.msra.mxu0 0.0
  %1508 = vmatpush.msra.mxu0 0.0
  %1509 = vmatpush.msra.mxu0 0.0
  %1510 = vmatpush.msra.mxu0 0.0
  %1511 = vmatpush.msra.mxu0 0.0
  %1512 = vmatpush.msra.mxu0 0.0
  %1513 = vmatpush.msra.mxu0 0.0
  %1514 = vmatpush.msra.mxu0 0.0
  %1515 = vmatpush.msra.mxu0 0.0
  %1516 = vmatpush.msra.mxu0 0.0
  %1517 = vmatpush.msra.mxu0 %v297
  %1518 = vmatmul.f32.gmra.mxu0 %v1500
  %v1519 = vpop.f32.mrf.mxu0
  %v1520 = vadd.f32 0.0, %v1519
  %1521 = vdwg.mxu0
  %v1522 = vperm.slane %v1520, 0
  %v1523 = vmul.f32 %v1418, %v1522
  %v1524 = vmul.f32 %v1420, %v1522
  %v1525 = vmul.f32 %v1423, %v1522
  %v1526 = vmul.f32 %v1425, %v1522
  %v1527 = vperm.slane %v1520, 1
  %v1528 = vadd.f32 %v1523, %v1527
  %v1529 = vadd.f32 %v1524, %v1527
  %v1530 = vadd.f32 %v1525, %v1527
  %v1531 = vadd.f32 %v1526, %v1527
  %v1532 = vadd.f32 %v1306, %v1528
  %v1533 = vadd.f32 %v1307, %v1529
  %v1534 = vadd.f32 %v1308, %v1530
  %v1535 = vadd.f32 %v1309, %v1531
  %v1536 = vmax.f32 %v1532, 0.0
  %v1537 = vmax.f32 %v1533, 0.0
  %v1538 = vmax.f32 %v1534, 0.0
  %v1539 = vmax.f32 %v1535, 0.0
  %1540 = vst [vmem:[%s6] sm:$0xff] %v1536
  %1541 = vst [vmem:[%s6 + $0x8] sm:$0xff] %v1537
  %1542 = vst [vmem:[%s6 + $0x10] sm:$0xff] %v1538
  %1543 = vst [vmem:[%s6 + $0x18] sm:$0xff] %v1539
  // Predicated region
  $region26: #{basic_block_forward.1} parent=0 // pred_check
    _
  $region27: #{basic_block_forward.1} parent=0 // pred_check_branch
    %1545 = sbr.rel (0) target = $region29
  $region28: #{basic_block_forward.1} parent=0 // pred_region
    _
  $region29: #{basic_block_forward.1} parent=0 // pred_fallthru
    _
  // Predicated region
  $region30: #{basic_block_forward.1} parent=0 // pred_check
    _
  $region31: #{basic_block_forward.1} parent=0 // pred_check_branch
    %1547 = sbr.rel (0) target = $region33
  $region32: #{basic_block_forward.1} parent=0 // pred_region
    _
  $region33: #{basic_block_forward.1} parent=0 // pred_fallthru
    _

</llo_original>
